<compile_context>
chip_gen: v7x
topology: tpu7x:2x2x1
jax: 0.10.0
libtpu: 0.0.40
codegen_flags: <defaults>
</compile_context>

<pallas_src>
import functools

import jax
import jax.numpy as jnp
from jax import lax
from jax.experimental import pallas as pl
from jax.experimental.pallas import tpu as pltpu


def _supcon_kernel(fq_ref, fkt_ref, lq_ref, lk_ref, out_ref,
                   m_scr, l_scr, s_scr, p_scr,
                   *, inv_temperature, temp_ratio, block_q, block_k,
                   matmul_dtype):
    qi = pl.program_id(0)
    ki = pl.program_id(1)
    nk = pl.num_programs(1)

    # ---- per-q-tile running-stat init (k is the innermost reduction axis) ----
    @pl.when(ki == 0)
    def _init():
        m_scr[...] = jnp.full(m_scr.shape, -jnp.inf, m_scr.dtype)
        l_scr[...] = jnp.zeros(l_scr.shape, l_scr.dtype)
        s_scr[...] = jnp.zeros(s_scr.shape, s_scr.dtype)
        p_scr[...] = jnp.zeros(p_scr.shape, p_scr.dtype)

    # ---- similarity tile on the MXU ------------------------------------------
    # 1/T folded into the (tq, D) anchor operand (cheaper than scaling (tq, tk));
    # scale in f32 then cast (v5e has no bf16 VPU).  Contrast side is already
    # transposed, so the contraction is (lhs dim 1, rhs dim 0): no vxpose.
    fq = (fq_ref[...].astype(jnp.float32) * inv_temperature).astype(matmul_dtype)
    fkt = fkt_ref[...].astype(matmul_dtype)
    sim = jnp.dot(fq, fkt, preferred_element_type=jnp.float32)   # (tq, tk) f32

    # ---- masks ----------------------------------------------------------------
    row = qi * block_q + lax.broadcasted_iota(jnp.int32, sim.shape, 0)
    col = ki * block_k + lax.broadcasted_iota(jnp.int32, sim.shape, 1)
    not_self = (row != col).astype(jnp.float32)                  # 1 - identity

    lab_q_col = jnp.transpose(lq_ref[...])                       # (tq, 1) via XLU
    pos = (lab_q_col == lk_ref[...]).astype(jnp.float32) * not_self

    # ---- online-softmax running statistics -------------------------------------
    m_prev = m_scr[...]
    m_new = jnp.maximum(m_prev, jnp.max(sim, axis=1, keepdims=True))
    l_scr[...] = (jnp.exp(m_prev - m_new) * l_scr[...]
                  + jnp.sum(jnp.exp(sim - m_new) * not_self, axis=1, keepdims=True))
    s_scr[...] = s_scr[...] + jnp.sum(pos * sim, axis=1, keepdims=True)
    p_scr[...] = p_scr[...] + jnp.sum(pos, axis=1, keepdims=True)
    m_scr[...] = m_new

    # ---- finalize per-row loss on the last k tile ------------------------------
    @pl.when(ki == nk - 1)
    def _finalize():
        p = p_scr[...]
        p_safe = jnp.where(p < 1e-6, 1.0, p)
        # sum_j pos*log_prob = sum_j pos*sim - P*(rowmax + log(sum_j exp(sim-rowmax)*not_self))
        log_denom = m_scr[...] + jnp.log(l_scr[...])
        mean_log_prob_pos = (s_scr[...] - p * log_denom) / p_safe
        loss_rows = -temp_ratio * mean_log_prob_pos              # (tq, 1)
        out_ref[...] = jnp.transpose(loss_rows)                  # lane-dense (1, tq)


def _pick_block(n, target):
    """Largest tile <= target that divides n and keeps the lane dim legal
    (multiple of 128), else fall back to the full extent."""
    if n <= target:
        return n
    b = (min(target, n) // 128) * 128
    while b >= 128:
        if n % b == 0:
            return b
        b -= 128
    return n


def supcon_loss(feature, label, temperature=0.07, base_temperature=0.07,
                *, block_q=512, block_k=512, matmul_dtype=jnp.bfloat16):
    """Pallas TPU SupConLoss.forward.  Returns a float32 scalar.

    block_q/block_k: anchor/contrast tile sizes (defaults fit every TPU
    generation's default scoped VMEM; raise on v6e, cap ~1024 on v7x).
    matmul_dtype=bfloat16 runs the Gram matrix at the MXU's native rate on
    v5e/v6e/v7x (softmax math stays f32); use float32 for exact parity.
    """
    feature = feature.astype(jnp.float32)
    N, D = feature.shape
    # Contrast-side copy transposed once in the wrapper (O(N*D), outside the
    # O(N^2) tile loop) so the kernel's dot needs no per-tile XLU transpose.
    feature_t = jnp.swapaxes(feature, 0, 1)                      # (D, N)
    # Labels as ONE lane-dense (1, N) row; f32 equality is exact for class ids.
    lab_row = label.astype(jnp.float32).reshape(1, N)

    bq = _pick_block(N, block_q)
    bk = _pick_block(N, block_k)
    grid = (N // bq, N // bk)

    kernel = functools.partial(
        _supcon_kernel,
        inv_temperature=1.0 / float(temperature),
        temp_ratio=float(temperature) / float(base_temperature),
        block_q=bq, block_k=bk, matmul_dtype=matmul_dtype,
    )

    grid_spec = pltpu.PrefetchScalarGridSpec(
        num_scalar_prefetch=0,
        grid=grid,
        in_specs=[
            pl.BlockSpec((bq, D), lambda qi, ki: (qi, 0)),    # anchor features
            pl.BlockSpec((D, bk), lambda qi, ki: (0, ki)),    # contrast features (pre-transposed)
            pl.BlockSpec((1, bq), lambda qi, ki: (0, qi)),    # anchor labels (lane-dense)
            pl.BlockSpec((1, bk), lambda qi, ki: (0, ki)),    # contrast labels (lane-dense)
        ],
        out_specs=pl.BlockSpec((1, bq), lambda qi, ki: (0, qi)),
        scratch_shapes=[pltpu.VMEM((bq, 1), jnp.float32)] * 4,   # m, l, s, p
    )

    row_loss = pl.pallas_call(
        kernel,
        out_shape=jax.ShapeDtypeStruct((1, N), jnp.float32),
        grid_spec=grid_spec,
        compiler_params=pltpu.CompilerParams(
            # q parallel -> v7x's two TensorCores split anchor rows;
            # k is the online-softmax reduction -> last + arbitrary.
            dimension_semantics=("parallel", "arbitrary")),
    )(feature, feature_t, lab_row, lab_row)

    return jnp.mean(row_loss)


def _reference(feature, label, temperature=0.07, base_temperature=0.07):
    """Pure-JAX mirror of the PyTorch SupConLoss forward."""
    N = feature.shape[0]
    label = label.reshape(-1, 1)
    mask = (label == label.T).astype(jnp.float32)
    adc = jnp.dot(feature, feature.T,
                  precision=jax.lax.Precision.HIGHEST) / temperature
    logits = adc - jnp.max(adc, axis=1, keepdims=True)
    logits_mask = 1.0 - jnp.eye(N, dtype=jnp.float32)
    mask = mask * logits_mask
    exp_logits = jnp.exp(logits) * logits_mask
    log_prob = logits - jnp.log(jnp.sum(exp_logits, axis=1, keepdims=True))
    mpp = jnp.sum(mask, axis=1)
    mpp = jnp.where(mpp < 1e-6, 1.0, mpp)
    mean_log_prob_pos = jnp.sum(mask * log_prob, axis=1) / mpp
    return jnp.mean(-(temperature / base_temperature) * mean_log_prob_pos)


if __name__ == "__main__":
    key = jax.random.PRNGKey(0)
    kf, kl = jax.random.split(key)

    # Small, module-consistent shapes: a contrastive batch of N=256 anchors with
    # 128-dim L2-normalized embeddings, 4 classes.  block 128 exercises a real
    # (2, 2) grid; the N=16 case below covers the single-tile path.
    N, D, NUM_CLASSES = 256, 128, 4
    feature = jax.random.normal(kf, (N, D), jnp.float32)
    feature = feature / jnp.linalg.norm(feature, axis=1, keepdims=True)
    label = jax.random.randint(kl, (N,), 0, NUM_CLASSES, jnp.int32)

    ref = _reference(feature, label)

    # Exact-path check of the tiled online-softmax logic (f32 MXU operands).
    loss_f32 = jax.block_until_ready(
        supcon_loss(feature, label, block_q=128, block_k=128,
                    matmul_dtype=jnp.float32))
    assert jnp.allclose(loss_f32, ref, rtol=1e-3, atol=1e-3), (loss_f32, ref)

    # Recommended production path: bf16 MXU operands (looser tolerance since the
    # Gram matrix loses mantissa before the softmax).
    loss_bf16 = jax.block_until_ready(
        supcon_loss(feature, label, block_q=128, block_k=128,
                    matmul_dtype=jnp.bfloat16))
    assert jnp.allclose(loss_bf16, ref, rtol=5e-2, atol=5e-2), (loss_bf16, ref)

    # Single-tile (grid == (1, 1)) path at a tiny size.
    loss16 = jax.block_until_ready(
        supcon_loss(feature[:16], label[:16], matmul_dtype=jnp.float32))
    ref16 = _reference(feature[:16], label[:16])
    assert jnp.allclose(loss16, ref16, rtol=1e-3, atol=1e-3), (loss16, ref16)

    print("KERNEL_OK")
</pallas_src>

<mosaic_0001>
module attributes {stable_mosaic.version = 11 : i64} {
  func.func @_supcon_kernel(%arg0: i32, %arg1: i32, %arg2: memref<128x128xf32, #tpu.memory_space<vmem>>, %arg3: memref<128x128xf32, #tpu.memory_space<vmem>>, %arg4: memref<1x128xf32, #tpu.memory_space<vmem>>, %arg5: memref<1x128xf32, #tpu.memory_space<vmem>>, %arg6: memref<1x128xf32, #tpu.memory_space<vmem>>, %arg7: memref<128x1xf32, #tpu.memory_space<vmem>>, %arg8: memref<128x1xf32, #tpu.memory_space<vmem>>, %arg9: memref<128x1xf32, #tpu.memory_space<vmem>>, %arg10: memref<128x1xf32, #tpu.memory_space<vmem>>) attributes {dimension_semantics = [#tpu.dimension_semantics<parallel>, #tpu.dimension_semantics<arbitrary>], iteration_bounds = array<i64: 2, 2>, scalar_prefetch = 0 : i64, scratch_operands = 4 : i64, tpu.core_type = #tpu.core_type<tc>, window_params = [{transform_indices = @transform_0, window_bounds = array<i64: 128, 128>}, {transform_indices = @transform_1, window_bounds = array<i64: 128, 128>}, {transform_indices = @transform_2, window_bounds = array<i64: 1, 128>}, {transform_indices = @transform_3, window_bounds = array<i64: 1, 128>}, {transform_indices = @transform_4, window_bounds = array<i64: 1, 128>}]} {
    %c0_i32 = arith.constant 0 : i32
    %0 = arith.cmpi eq, %arg1, %c0_i32 : i32
    %1 = arith.extui %0 : i1 to i32
    %c0_i32_0 = arith.constant 0 : i32
    %2 = arith.cmpi ne, %1, %c0_i32_0 : i32
    scf.if %2 {
      %cst_31 = arith.constant 0xFF800000 : f32
      %59 = vector.broadcast %cst_31 : f32 to vector<128x1xf32>
      %c0_32 = arith.constant 0 : index
      %c0_33 = arith.constant 0 : index
      %60 = vector.load %arg7[%c0_32, %c0_33] : memref<128x1xf32, #tpu.memory_space<vmem>>, vector<128x1xf32>
      tpu.vector_store %arg7[%c0_32, %c0_33], %59 {strides = array<i32>} : memref<128x1xf32, #tpu.memory_space<vmem>>, vector<128x1xf32>,
      %cst_34 = arith.constant 0.000000e+00 : f32
      %61 = vector.broadcast %cst_34 : f32 to vector<128x1xf32>
      %c0_35 = arith.constant 0 : index
      %c0_36 = arith.constant 0 : index
      %62 = vector.load %arg8[%c0_35, %c0_36] : memref<128x1xf32, #tpu.memory_space<vmem>>, vector<128x1xf32>
      tpu.vector_store %arg8[%c0_35, %c0_36], %61 {strides = array<i32>} : memref<128x1xf32, #tpu.memory_space<vmem>>, vector<128x1xf32>,
      %cst_37 = arith.constant 0.000000e+00 : f32
      %63 = vector.broadcast %cst_37 : f32 to vector<128x1xf32>
      %c0_38 = arith.constant 0 : index
      %c0_39 = arith.constant 0 : index
      %64 = vector.load %arg9[%c0_38, %c0_39] : memref<128x1xf32, #tpu.memory_space<vmem>>, vector<128x1xf32>
      tpu.vector_store %arg9[%c0_38, %c0_39], %63 {strides = array<i32>} : memref<128x1xf32, #tpu.memory_space<vmem>>, vector<128x1xf32>,
      %cst_40 = arith.constant 0.000000e+00 : f32
      %65 = vector.broadcast %cst_40 : f32 to vector<128x1xf32>
      %c0_41 = arith.constant 0 : index
      %c0_42 = arith.constant 0 : index
      %66 = vector.load %arg10[%c0_41, %c0_42] : memref<128x1xf32, #tpu.memory_space<vmem>>, vector<128x1xf32>
      tpu.vector_store %arg10[%c0_41, %c0_42], %65 {strides = array<i32>} : memref<128x1xf32, #tpu.memory_space<vmem>>, vector<128x1xf32>,
    } else {
    }
    %c0 = arith.constant 0 : index
    %c0_1 = arith.constant 0 : index
    %3 = vector.load %arg2[%c0, %c0_1] : memref<128x128xf32, #tpu.memory_space<vmem>>, vector<128x128xf32>
    %cst = arith.constant 14.2857141 : f32
    %4 = vector.broadcast %cst : f32 to vector<128x128xf32>
    %5 = arith.mulf %3, %4 : vector<128x128xf32>
    %c0_2 = arith.constant 0 : index
    %c0_3 = arith.constant 0 : index
    %6 = vector.load %arg3[%c0_2, %c0_3] : memref<128x128xf32, #tpu.memory_space<vmem>>, vector<128x128xf32>
    %cst_4 = arith.constant dense<0.000000e+00> : vector<128x128xf32>
    %7 = tpu.matmul %5, %6, %cst_4 {dimension_numbers = #tpu.dot_dimension_numbers<[1], [0], [0], [1], [0, 0, 1, 1], [], []>} : vector<128x128xf32>, vector<128x128xf32>, vector<128x128xf32> -> vector<128x128xf32>
    %c128_i32 = arith.constant 128 : i32
    %8 = arith.muli %arg0, %c128_i32 : i32
    %9 = tpu.iota {dimensions = array<i32: 0>} : vector<128x128xi32>
    %10 = vector.broadcast %8 : i32 to vector<128x128xi32>
    %11 = arith.addi %10, %9 : vector<128x128xi32>
    %c128_i32_5 = arith.constant 128 : i32
    %12 = arith.muli %arg1, %c128_i32_5 : i32
    %13 = tpu.iota {dimensions = array<i32: 1>} : vector<128x128xi32>
    %14 = vector.broadcast %12 : i32 to vector<128x128xi32>
    %15 = arith.addi %14, %13 : vector<128x128xi32>
    %16 = arith.cmpi ne, %11, %15 : vector<128x128xi32>
    %17 = arith.extui %16 : vector<128x128xi1> to vector<128x128xi32>
    %18 = arith.sitofp %17 : vector<128x128xi32> to vector<128x128xf32>
    %c0_6 = arith.constant 0 : index
    %c0_7 = arith.constant 0 : index
    %19 = vector.load %arg4[%c0_6, %c0_7] : memref<1x128xf32, #tpu.memory_space<vmem>>, vector<1x128xf32>
    %20 = tpu.transpose %19, [1, 0] : vector<1x128xf32> -> vector<128x1xf32>
    %c0_8 = arith.constant 0 : index
    %c0_9 = arith.constant 0 : index
    %21 = vector.load %arg5[%c0_8, %c0_9] : memref<1x128xf32, #tpu.memory_space<vmem>>, vector<1x128xf32>
    %22 = vector.broadcast %20 : vector<128x1xf32> to vector<128x128xf32>
    %23 = vector.broadcast %21 : vector<1x128xf32> to vector<128x128xf32>
    %24 = arith.cmpf oeq, %22, %23 : vector<128x128xf32>
    %25 = arith.extui %24 : vector<128x128xi1> to vector<128x128xi32>
    %26 = arith.sitofp %25 : vector<128x128xi32> to vector<128x128xf32>
    %27 = arith.mulf %26, %18 : vector<128x128xf32>
    %c0_10 = arith.constant 0 : index
    %c0_11 = arith.constant 0 : index
    %28 = vector.load %arg7[%c0_10, %c0_11] : memref<128x1xf32, #tpu.memory_space<vmem>>, vector<128x1xf32>
    %cst_12 = arith.constant dense<0xFF800000> : vector<128xf32>
    %29 = vector.multi_reduction <maximumf>, %7, %cst_12 [1] : vector<128x128xf32> to vector<128xf32>
    %30 = vector.shape_cast %29 : vector<128xf32> to vector<128x1xf32>
    %31 = arith.maximumf %28, %30 : vector<128x1xf32>
    %32 = arith.subf %28, %31 : vector<128x1xf32>
    %33 = math.exp %32 : vector<128x1xf32>
    %c0_13 = arith.constant 0 : index
    %c0_14 = arith.constant 0 : index
    %34 = vector.load %arg8[%c0_13, %c0_14] : memref<128x1xf32, #tpu.memory_space<vmem>>, vector<128x1xf32>
    %35 = arith.mulf %33, %34 : vector<128x1xf32>
    %36 = vector.broadcast %31 : vector<128x1xf32> to vector<128x128xf32>
    %37 = arith.subf %7, %36 : vector<128x128xf32>
    %38 = math.exp %37 : vector<128x128xf32>
    %39 = arith.mulf %38, %18 : vector<128x128xf32>
    %cst_15 = arith.constant dense<0.000000e+00> : vector<128xf32>
    %40 = vector.multi_reduction <add>, %39, %cst_15 [1] : vector<128x128xf32> to vector<128xf32>
    %41 = vector.shape_cast %40 : vector<128xf32> to vector<128x1xf32>
    %42 = arith.addf %35, %41 : vector<128x1xf32>
    %c0_16 = arith.constant 0 : index
    %c0_17 = arith.constant 0 : index
    %43 = vector.load %arg8[%c0_16, %c0_17] : memref<128x1xf32, #tpu.memory_space<vmem>>, vector<128x1xf32>
    tpu.vector_store %arg8[%c0_16, %c0_17], %42 {strides = array<i32>} : memref<128x1xf32, #tpu.memory_space<vmem>>, vector<128x1xf32>,
    %c0_18 = arith.constant 0 : index
    %c0_19 = arith.constant 0 : index
    %44 = vector.load %arg9[%c0_18, %c0_19] : memref<128x1xf32, #tpu.memory_space<vmem>>, vector<128x1xf32>
    %45 = arith.mulf %27, %7 : vector<128x128xf32>
    %cst_20 = arith.constant dense<0.000000e+00> : vector<128xf32>
    %46 = vector.multi_reduction <add>, %45, %cst_20 [1] : vector<128x128xf32> to vector<128xf32>
    %47 = vector.shape_cast %46 : vector<128xf32> to vector<128x1xf32>
    %48 = arith.addf %44, %47 : vector<128x1xf32>
    %c0_21 = arith.constant 0 : index
    %c0_22 = arith.constant 0 : index
    %49 = vector.load %arg9[%c0_21, %c0_22] : memref<128x1xf32, #tpu.memory_space<vmem>>, vector<128x1xf32>
    tpu.vector_store %arg9[%c0_21, %c0_22], %48 {strides = array<i32>} : memref<128x1xf32, #tpu.memory_space<vmem>>, vector<128x1xf32>,
    %c0_23 = arith.constant 0 : index
    %c0_24 = arith.constant 0 : index
    %50 = vector.load %arg10[%c0_23, %c0_24] : memref<128x1xf32, #tpu.memory_space<vmem>>, vector<128x1xf32>
    %cst_25 = arith.constant dense<0.000000e+00> : vector<128xf32>
    %51 = vector.multi_reduction <add>, %27, %cst_25 [1] : vector<128x128xf32> to vector<128xf32>
    %52 = vector.shape_cast %51 : vector<128xf32> to vector<128x1xf32>
    %53 = arith.addf %50, %52 : vector<128x1xf32>
    %c0_26 = arith.constant 0 : index
    %c0_27 = arith.constant 0 : index
    %54 = vector.load %arg10[%c0_26, %c0_27] : memref<128x1xf32, #tpu.memory_space<vmem>>, vector<128x1xf32>
    tpu.vector_store %arg10[%c0_26, %c0_27], %53 {strides = array<i32>} : memref<128x1xf32, #tpu.memory_space<vmem>>, vector<128x1xf32>,
    %c0_28 = arith.constant 0 : index
    %c0_29 = arith.constant 0 : index
    %55 = vector.load %arg7[%c0_28, %c0_29] : memref<128x1xf32, #tpu.memory_space<vmem>>, vector<128x1xf32>
    tpu.vector_store %arg7[%c0_28, %c0_29], %31 {strides = array<i32>} : memref<128x1xf32, #tpu.memory_space<vmem>>, vector<128x1xf32>,
    %c1_i32 = arith.constant 1 : i32
    %56 = arith.cmpi eq, %arg1, %c1_i32 : i32
    %57 = arith.extui %56 : i1 to i32
    %c0_i32_30 = arith.constant 0 : i32
    %58 = arith.cmpi ne, %57, %c0_i32_30 : i32
    scf.if %58 {
      %c0_31 = arith.constant 0 : index
      %c0_32 = arith.constant 0 : index
      %59 = vector.load %arg10[%c0_31, %c0_32] : memref<128x1xf32, #tpu.memory_space<vmem>>, vector<128x1xf32>
      %cst_33 = arith.constant 9.99999997E-7 : f32
      %60 = vector.broadcast %cst_33 : f32 to vector<128x1xf32>
      %61 = arith.cmpf olt, %59, %60 : vector<128x1xf32>
      %cst_34 = arith.constant 1.000000e+00 : f32
      %62 = vector.broadcast %cst_34 : f32 to vector<128x1xf32>
      %63 = arith.select %61, %62, %59 : vector<128x1xi1>, vector<128x1xf32>
      %c0_35 = arith.constant 0 : index
      %c0_36 = arith.constant 0 : index
      %64 = vector.load %arg7[%c0_35, %c0_36] : memref<128x1xf32, #tpu.memory_space<vmem>>, vector<128x1xf32>
      %c0_37 = arith.constant 0 : index
      %c0_38 = arith.constant 0 : index
      %65 = vector.load %arg8[%c0_37, %c0_38] : memref<128x1xf32, #tpu.memory_space<vmem>>, vector<128x1xf32>
      %66 = math.log %65 : vector<128x1xf32>
      %67 = arith.addf %64, %66 : vector<128x1xf32>
      %c0_39 = arith.constant 0 : index
      %c0_40 = arith.constant 0 : index
      %68 = vector.load %arg9[%c0_39, %c0_40] : memref<128x1xf32, #tpu.memory_space<vmem>>, vector<128x1xf32>
      %69 = arith.mulf %59, %67 : vector<128x1xf32>
      %70 = arith.subf %68, %69 : vector<128x1xf32>
      %71 = arith.divf %70, %63 : vector<128x1xf32>
      %cst_41 = arith.constant -1.000000e+00 : f32
      %72 = vector.broadcast %cst_41 : f32 to vector<128x1xf32>
      %73 = arith.mulf %72, %71 : vector<128x1xf32>
      %74 = tpu.transpose %73, [1, 0] : vector<128x1xf32> -> vector<1x128xf32>
      %c0_42 = arith.constant 0 : index
      %c0_43 = arith.constant 0 : index
      %75 = vector.load %arg6[%c0_42, %c0_43] : memref<1x128xf32, #tpu.memory_space<vmem>>, vector<1x128xf32>
      tpu.vector_store %arg6[%c0_42, %c0_43], %74 {strides = array<i32>} : memref<1x128xf32, #tpu.memory_space<vmem>>, vector<1x128xf32>,
    } else {
    }
    return
  }
  func.func @transform_0(%arg0: i32, %arg1: i32) -> (i32, i32) {
    %c0_i32 = arith.constant 0 : i32
    %c0_i32_0 = arith.constant 0 : i32
    return %arg0, %c0_i32 : i32, i32
  }
  func.func @transform_1(%arg0: i32, %arg1: i32) -> (i32, i32) {
    %c0_i32 = arith.constant 0 : i32
    %c0_i32_0 = arith.constant 0 : i32
    return %c0_i32, %arg1 : i32, i32
  }
  func.func @transform_2(%arg0: i32, %arg1: i32) -> (i32, i32) {
    %c0_i32 = arith.constant 0 : i32
    %c0_i32_0 = arith.constant 0 : i32
    return %c0_i32, %arg0 : i32, i32
  }
  func.func @transform_3(%arg0: i32, %arg1: i32) -> (i32, i32) {
    %c0_i32 = arith.constant 0 : i32
    %c0_i32_0 = arith.constant 0 : i32
    return %c0_i32, %arg1 : i32, i32
  }
  func.func @transform_4(%arg0: i32, %arg1: i32) -> (i32, i32) {
    %c0_i32 = arith.constant 0 : i32
    %c0_i32_0 = arith.constant 0 : i32
    return %c0_i32, %arg0 : i32, i32
  }
}

</mosaic_0001>

<llo_original>
// kernel: tpu_custom_call.1
$region0: #{tpu_custom_call.1}
  #allocation0 [shape = 'u32[]', space=smem, size = 0x4, offset = 0x4, fixed_abs, tag = 'smem constant byte address 0x4 - core index']
  #allocation1 [shape = 'u32[144,128]{1,0:T(1,128)}', space=vmem, size = 0x12000, scoped, tag = 'internal scratch']
  #allocation2 [shape = 'f32[128,1]{1,0:T(8,128)}', space=vmem, size = 0x10000, scoped, tag = 'scratch operand']
  #allocation3 [shape = 'f32[128,1]{1,0:T(8,128)}', space=vmem, size = 0x10000, scoped, tag = 'scratch operand']
  #allocation4 [shape = 'f32[128,1]{1,0:T(8,128)}', space=vmem, size = 0x10000, scoped, tag = 'scratch operand']
  #allocation5 [shape = 'f32[128,1]{1,0:T(8,128)}', space=vmem, size = 0x10000, scoped, tag = 'scratch operand']
  %s0 = inlined_call_operand.hbm [shape: f32[256,128], index: 0, kind: input, shape index: {}]
  %s1 = inlined_call_operand.hbm [shape: f32[128,256], index: 1, kind: input, shape index: {}]
  %s2 = inlined_call_operand.vmem [shape: f32[1,256], index: 2, kind: input, shape index: {}]
  %s3 = inlined_call_operand.vmem [shape: f32[1,256], index: 3, kind: input, shape index: {}]
  %s4 = inlined_call_operand.hbm [shape: f32[1,256], index: 4, kind: output, shape index: {}]
  %s5 = sld [smem:[#allocation0]]
  $region65: #{tpu_custom_call.1} parent=0
    _
  %s7 = ssub.s32 1, %s5
  %s8 = scalar_select 0, %s7, %s5
  $region1: #{tpu_custom_call.1} parent=0
    #allocation6 [shape = 'u8[131072]{0}', space=vmem, size = 0x20000, scoped, tag = 'input window, operand 0']
    #allocation7 [shape = 's32[2]{0}', space=sflag, size = 0x8, scoped, tag = 'scoped memory for tpu_custom_call.1']
    #allocation8 [shape = 's32[2]{0}', space=sflag, size = 0x8, scoped, tag = 'scoped memory for tpu_custom_call.1']
    #allocation9 [shape = 'u8[131072]{0}', space=vmem, size = 0x20000, scoped, tag = 'input window, operand 1']
    #allocation10 [shape = 's32[2]{0}', space=sflag, size = 0x8, scoped, tag = 'scoped memory for tpu_custom_call.1']
    #allocation11 [shape = 'u8[1024]{0}', space=vmem, size = 0x400, scoped, tag = 'output window, operand 0']
    %9 = vsyncpa [#allocation7], 0
    %s10 = scalar_lea.sflag [#allocation7], 1
    %11 = vsyncpa %s10, 0
    %12 = vsyncpa [#allocation10], 0
    %s13 = scalar_lea.sflag [#allocation10], 1
    %14 = vsyncpa %s13, 0
    %15 = vsyncpa [#allocation8], 0
    %s16 = scalar_lea.sflag [#allocation8], 1
    %17 = vsyncpa %s16, 0
    loop: start=0, step=1, limit=6
    $region2: #{tpu_custom_call.1} parent=1 // loop_pre_header
      _
    $region3: #{tpu_custom_call.1} parent=1 // loop_header
      %s19 = sphi 0, %s23
      %p20 = scmp.ge.s32.totalorder %s19, 6
      %s26 = sphi 0, %s38
      %s27 = sphi 0, %s34
      %s28 = sphi 0, %s26
      %s29 = sphi 0, %s27
      %s30 = sphi 0, %s28
      %s31 = sphi 0, %s29
      %s41 = sphi 0, %s43
      %s44 = sphi 0, %s41
      %s45 = sphi 0, %s44
      %s61 = sphi 0, %s45
      %s67 = sphi 0, %s69
      %s70 = sphi 0, %s67
      %s71 = sphi 0, %s70
      %s87 = sphi 0, %s71
      %s93 = sphi 0, %s95
      %s96 = sphi 0, %s93
      %s97 = sphi 0, %s96
      %s113 = sphi 0, %s97
      %s119 = sphi 0, %s121
      %s122 = sphi 0, %s119
      %s123 = sphi 0, %s122
      %s139 = sphi 0, %s123
      %s145 = sphi 0, %s147
      %s148 = sphi 0, %s145
      %s149 = sphi 0, %s148
      %s165 = sphi 0, %s149
    $region4: #{tpu_custom_call.1} parent=1 // loop_header_branch
      %22 = sbr.rel (%p20) target = $region8
    $region5: #{tpu_custom_call.1} parent=1 // loop_body
      %s24 = ssub.s32 %s19, 1
      %s25 = ssub.s32 %s19, 2
      %s32 = sadd.s32 1, %s27
      %p33 = scmp.ge.s32.totalorder %s32, 2
      %s34 = scalar_select %p33, 0, %s32
      %s35 = sadd.s32 1, %s26
      %s36 = scalar_select %p33, %s35, %s26
      %p37 = scmp.ge.s32.totalorder %s36, 2
      %s38 = scalar_select %p37, 0, %s36
      %s39 = ssub.s32 %s26, %s38
      %p40 = scmp.eq.s32.totalorder %s39, 0
      %s42 = sadd.s32 %s41, 1
      %s43 = scalar_select %p40, %s41, %s42
      %p46 = pneg %p40
      %p47 = scmp.eq.s32.totalorder %s19, 3
      %p48 = por %p46, %p47
      %p49 = scmp.ne.s32.totalorder %s41, %s44
      %p50 = scmp.eq.s32.totalorder %s19, 0
      %p51 = por %p49, %p50
      %p52 = scmp.ne.s32.totalorder %s41, %s44
      %p53 = scmp.eq.s32.totalorder %s24, 3
      %p54 = por %p52, %p53
      %p55 = scmp.ne.s32.totalorder %s44, %s45
      %p56 = scmp.eq.s32.totalorder %s24, 0
      %p57 = por %p55, %p56
      %p58 = scmp.ne.s32.totalorder %s44, %s45
      %p59 = scmp.eq.s32.totalorder %s25, 3
      %p60 = por %p58, %p59
      %p62 = scmp.ne.s32.totalorder %s45, %s61
      %p63 = scmp.eq.s32.totalorder %s25, 0
      %p64 = por %p62, %p63
      %s65 = ssub.s32 %s27, %s34
      %p66 = scmp.eq.s32.totalorder %s65, 0
      %s68 = sadd.s32 %s67, 1
      %s69 = scalar_select %p66, %s67, %s68
      %p72 = pneg %p66
      %p73 = scmp.eq.s32.totalorder %s19, 3
      %p74 = por %p72, %p73
      %p75 = scmp.ne.s32.totalorder %s67, %s70
      %p76 = scmp.eq.s32.totalorder %s19, 0
      %p77 = por %p75, %p76
      %p78 = scmp.ne.s32.totalorder %s67, %s70
      %p79 = scmp.eq.s32.totalorder %s24, 3
      %p80 = por %p78, %p79
      %p81 = scmp.ne.s32.totalorder %s70, %s71
      %p82 = scmp.eq.s32.totalorder %s24, 0
      %p83 = por %p81, %p82
      %p84 = scmp.ne.s32.totalorder %s70, %s71
      %p85 = scmp.eq.s32.totalorder %s25, 3
      %p86 = por %p84, %p85
      %p88 = scmp.ne.s32.totalorder %s71, %s87
      %p89 = scmp.eq.s32.totalorder %s25, 0
      %p90 = por %p88, %p89
      %s91 = ssub.s32 %s26, %s38
      %p92 = scmp.eq.s32.totalorder %s91, 0
      %s94 = sadd.s32 %s93, 1
      %s95 = scalar_select %p92, %s93, %s94
      %p98 = pneg %p92
      %p99 = scmp.eq.s32.totalorder %s19, 3
      %p100 = por %p98, %p99
      %p101 = scmp.ne.s32.totalorder %s93, %s96
      %p102 = scmp.eq.s32.totalorder %s19, 0
      %p103 = por %p101, %p102
      %p104 = scmp.ne.s32.totalorder %s93, %s96
      %p105 = scmp.eq.s32.totalorder %s24, 3
      %p106 = por %p104, %p105
      %p107 = scmp.ne.s32.totalorder %s96, %s97
      %p108 = scmp.eq.s32.totalorder %s24, 0
      %p109 = por %p107, %p108
      %p110 = scmp.ne.s32.totalorder %s96, %s97
      %p111 = scmp.eq.s32.totalorder %s25, 3
      %p112 = por %p110, %p111
      %p114 = scmp.ne.s32.totalorder %s97, %s113
      %p115 = scmp.eq.s32.totalorder %s25, 0
      %p116 = por %p114, %p115
      %s117 = ssub.s32 %s27, %s34
      %p118 = scmp.eq.s32.totalorder %s117, 0
      %s120 = sadd.s32 %s119, 1
      %s121 = scalar_select %p118, %s119, %s120
      %p124 = pneg %p118
      %p125 = scmp.eq.s32.totalorder %s19, 3
      %p126 = por %p124, %p125
      %p127 = scmp.ne.s32.totalorder %s119, %s122
      %p128 = scmp.eq.s32.totalorder %s19, 0
      %p129 = por %p127, %p128
      %p130 = scmp.ne.s32.totalorder %s119, %s122
      %p131 = scmp.eq.s32.totalorder %s24, 3
      %p132 = por %p130, %p131
      %p133 = scmp.ne.s32.totalorder %s122, %s123
      %p134 = scmp.eq.s32.totalorder %s24, 0
      %p135 = por %p133, %p134
      %p136 = scmp.ne.s32.totalorder %s122, %s123
      %p137 = scmp.eq.s32.totalorder %s25, 3
      %p138 = por %p136, %p137
      %p140 = scmp.ne.s32.totalorder %s123, %s139
      %p141 = scmp.eq.s32.totalorder %s25, 0
      %p142 = por %p140, %p141
      %s143 = ssub.s32 %s26, %s38
      %p144 = scmp.eq.s32.totalorder %s143, 0
      %s146 = sadd.s32 %s145, 1
      %s147 = scalar_select %p144, %s145, %s146
      %p150 = pneg %p144
      %p151 = scmp.eq.s32.totalorder %s19, 3
      %p152 = por %p150, %p151
      %p153 = scmp.ne.s32.totalorder %s145, %s148
      %p154 = scmp.eq.s32.totalorder %s19, 0
      %p155 = por %p153, %p154
      %p156 = scmp.ne.s32.totalorder %s145, %s148
      %p157 = scmp.eq.s32.totalorder %s24, 3
      %p158 = por %p156, %p157
      %p159 = scmp.ne.s32.totalorder %s148, %s149
      %p160 = scmp.eq.s32.totalorder %s24, 0
      %p161 = por %p159, %p160
      %p162 = scmp.ne.s32.totalorder %s148, %s149
      %p163 = scmp.eq.s32.totalorder %s25, 3
      %p164 = por %p162, %p163
      %p166 = scmp.ne.s32.totalorder %s149, %s165
      %p167 = scmp.eq.s32.totalorder %s25, 0
      %p168 = por %p166, %p167
      %p169 = scmp.le.s32.totalorder 1, %s19
      %p170 = scmp.lt.s32.totalorder %s19, 5
      %p171 = pnand %p169, %p170
      %p172 = pneg %p171
      // Predicated region
      $region9: #{tpu_custom_call.1} parent=5 // pred_check
        _
      $region10: #{tpu_custom_call.1} parent=5 // pred_check_branch
        %174 = sbr.rel (%p171) target = $region12
      $region11: #{tpu_custom_call.1} parent=5 // pred_region
        %s175 = ssub.s32 %s19, 1
      $region12: #{tpu_custom_call.1} parent=5 // pred_fallthru
        _
      %p176 = scmp.lt.s32.totalorder %s19, 4
      // Predicated region
      $region13: #{tpu_custom_call.1} parent=5 // pred_check
        %p177 = pneg %p176
      $region14: #{tpu_custom_call.1} parent=5 // pred_check_branch
        %179 = sbr.rel (%p177) target = $region16
      $region15: #{tpu_custom_call.1} parent=5 // pred_region
        // Predicated region
        $region17: #{tpu_custom_call.1} parent=15 // pred_check
          %p180 = pneg %p51
        $region18: #{tpu_custom_call.1} parent=15 // pred_check_branch
          %182 = sbr.rel (%p180) target = $region20
        $region19: #{tpu_custom_call.1} parent=15 // pred_region
          %s183 = sand.u32 %s41, 1
          %s184 = scalar_lea.sflag [#allocation7], %s183
          %s185 = sand.u32 %s41, 1
          %s186 = smul.addr %s185, 128
          %s187 = scalar_lea.vmem [#allocation6], %s186
          %s188 = smul.u32 16, %s26
          %s190 = ssub.s32 2048, 2048
          %191 = vsyncadd %s184, %s190
          %s192 = smul.addr %s188, 128
          %s193 = scalar_lea.hbm %s0, %s192
          %s194 = sshll.u32 %s187, 4
          %s195 = int_to_ptr.vmem [resolvable:$true] %s194
          %200 = dma.hbm_to_vmem [thread:$0]  %s193, 2048, %s195, %s184, 128, 128, 8
        $region20: #{tpu_custom_call.1} parent=15 // pred_fallthru
          _
        // Predicated region
        $region21: #{tpu_custom_call.1} parent=15 // pred_check
          %p201 = pneg %p77
        $region22: #{tpu_custom_call.1} parent=15 // pred_check_branch
          %203 = sbr.rel (%p201) target = $region24
        $region23: #{tpu_custom_call.1} parent=15 // pred_region
          %s204 = sand.u32 %s67, 1
          %s205 = scalar_lea.sflag [#allocation10], %s204
          %s206 = sand.u32 %s67, 1
          %s207 = smul.addr %s206, 128
          %s208 = scalar_lea.vmem [#allocation9], %s207
          %s210 = ssub.s32 2048, 2048
          %211 = vsyncadd %s205, %s210
          %s212 = smul.addr %s27, 128
          %s213 = scalar_lea.hbm %s1, %s212
          %s214 = sshll.u32 %s208, 4
          %s215 = int_to_ptr.vmem [resolvable:$true] %s214
          %220 = dma.hbm_to_vmem [thread:$0]  %s213, 2048, %s215, %s205, 256, 128, 8
        $region24: #{tpu_custom_call.1} parent=15 // pred_fallthru
          _
        // Predicated region
        $region25: #{tpu_custom_call.1} parent=15 // pred_check
          %p221 = pneg %p103
        $region26: #{tpu_custom_call.1} parent=15 // pred_check_branch
          %223 = sbr.rel (%p221) target = $region28
        $region27: #{tpu_custom_call.1} parent=15 // pred_region
          %p224 = scmp.lt.s32.totalorder %s26, 1
          %s225 = scalar_select %p224, %s26, 1
          %s226 = scalar_lea.vmem %s2, %s225
        $region28: #{tpu_custom_call.1} parent=15 // pred_fallthru
          _
        // Predicated region
        $region29: #{tpu_custom_call.1} parent=15 // pred_check
          %p227 = pneg %p129
        $region30: #{tpu_custom_call.1} parent=15 // pred_check_branch
          %229 = sbr.rel (%p227) target = $region32
        $region31: #{tpu_custom_call.1} parent=15 // pred_region
          %p230 = scmp.lt.s32.totalorder %s27, 1
          %s231 = scalar_select %p230, %s27, 1
          %s232 = scalar_lea.vmem %s3, %s231
        $region32: #{tpu_custom_call.1} parent=15 // pred_fallthru
          _
      $region16: #{tpu_custom_call.1} parent=5 // pred_fallthru
        _
      %p233 = scmp.le.s32.totalorder 1, %s19
      %p234 = scmp.lt.s32.totalorder %s19, 5
      %p235 = pnand %p233, %p234
      %p236 = pneg %p235
      // Predicated region
      $region33: #{tpu_custom_call.1} parent=5 // pred_check
        _
      $region34: #{tpu_custom_call.1} parent=5 // pred_check_branch
        %238 = sbr.rel (%p235) target = $region36
      $region35: #{tpu_custom_call.1} parent=5 // pred_region
        %s239 = ssub.s32 %s19, 1
        %s240 = sand.u32 %s44, 1
        %s241 = scalar_lea.sflag [#allocation7], %s240
        %s242 = sand.u32 %s44, 1
        %s243 = smul.addr %s242, 128
        %s244 = scalar_lea.vmem [#allocation6], %s243
        // Predicated region
        $region37: #{tpu_custom_call.1} parent=35 // pred_check
          %p245 = pneg %p57
        $region38: #{tpu_custom_call.1} parent=35 // pred_check_branch
          %247 = sbr.rel (%p245) target = $region40
        $region39: #{tpu_custom_call.1} parent=35 // pred_region
          %248 = dma.done %s241, 2048
        $region40: #{tpu_custom_call.1} parent=35 // pred_fallthru
          _
        %s249 = sand.u32 %s70, 1
        %s250 = scalar_lea.sflag [#allocation10], %s249
        %s251 = sand.u32 %s70, 1
        %s252 = smul.addr %s251, 128
        %s253 = scalar_lea.vmem [#allocation9], %s252
        // Predicated region
        $region41: #{tpu_custom_call.1} parent=35 // pred_check
          %p254 = pneg %p83
        $region42: #{tpu_custom_call.1} parent=35 // pred_check_branch
          %256 = sbr.rel (%p254) target = $region44
        $region43: #{tpu_custom_call.1} parent=35 // pred_region
          %257 = dma.done %s250, 2048
        $region44: #{tpu_custom_call.1} parent=35 // pred_fallthru
          _
        %s258 = sand.u32 %s44, 1
        %s259 = scalar_lea.sflag [#allocation7], %s258
        %s260 = sand.u32 %s44, 1
        %s261 = smul.addr %s260, 128
        %s262 = scalar_lea.vmem [#allocation6], %s261
        %p263 = pneg %p57
        %p264 = pneg %p54
        %s265 = sand.u32 %s70, 1
        %s266 = scalar_lea.sflag [#allocation10], %s265
        %s267 = sand.u32 %s70, 1
        %s268 = smul.addr %s267, 128
        %s269 = scalar_lea.vmem [#allocation9], %s268
        %p270 = pneg %p83
        %p271 = pneg %p80
        %p272 = scmp.lt.s32.totalorder %s28, 1
        %s273 = scalar_select %p272, %s28, 1
        %s274 = scalar_lea.vmem %s2, %s273
        %p275 = pneg %p109
        %p276 = pneg %p106
        %p277 = scmp.lt.s32.totalorder %s29, 1
        %s278 = scalar_select %p277, %s29, 1
        %s279 = scalar_lea.vmem %s3, %s278
        %p280 = pneg %p135
        %p281 = pneg %p132
        %p282 = pneg %p161
        %p283 = pneg %p158
        %s284 = sand.u32 %s148, 1
        %s285 = scalar_lea.sflag [#allocation8], %s284
        %s286 = sand.u32 %s148, 1
        %s287 = scalar_lea.vmem [#allocation11], %s286
        %s288 = smul.u32 16, %s28
        %p289 = scmp.lt.s32.totalorder %s28, 1
        %s290 = scalar_select %p289, %s28, 1
        %s291 = scalar_lea.vmem %s2, %s290
        %p292 = scmp.lt.s32.totalorder %s29, 1
        %s293 = scalar_select %p292, %s29, 1
        %s294 = scalar_lea.vmem %s3, %s293
        %p295 = scmp.eq.s32.totalorder %s29, 0
        // Predicated region
        $region45: #{tpu_custom_call.1} parent=35 // pred_check
          %p296 = pneg %p295
        $region46: #{tpu_custom_call.1} parent=35 // pred_check_branch
          %298 = sbr.rel (%p296) target = $region48
        $region47: #{tpu_custom_call.1} parent=35 // pred_region
          %vm299 = vcmask 7168
          %300 = vst.msk [vmem:[#allocation2] sm:$0xff] %vm299, -inf
          %301 = vst.msk [vmem:[#allocation2 + $0x8] sm:$0xff] %vm299, -inf
          %302 = vst.msk [vmem:[#allocation2 + $0x10] sm:$0xff] %vm299, -inf
          %303 = vst.msk [vmem:[#allocation2 + $0x18] sm:$0xff] %vm299, -inf
          %304 = vst.msk [vmem:[#allocation2 + $0x20] sm:$0xff] %vm299, -inf
          %305 = vst.msk [vmem:[#allocation2 + $0x28] sm:$0xff] %vm299, -inf
          %306 = vst.msk [vmem:[#allocation2 + $0x30] sm:$0xff] %vm299, -inf
          %307 = vst.msk [vmem:[#allocation2 + $0x38] sm:$0xff] %vm299, -inf
          %308 = vst.msk [vmem:[#allocation2 + $0x40] sm:$0xff] %vm299, -inf
          %309 = vst.msk [vmem:[#allocation2 + $0x48] sm:$0xff] %vm299, -inf
          %310 = vst.msk [vmem:[#allocation2 + $0x50] sm:$0xff] %vm299, -inf
          %311 = vst.msk [vmem:[#allocation2 + $0x58] sm:$0xff] %vm299, -inf
          %312 = vst.msk [vmem:[#allocation2 + $0x60] sm:$0xff] %vm299, -inf
          %313 = vst.msk [vmem:[#allocation2 + $0x68] sm:$0xff] %vm299, -inf
          %314 = vst.msk [vmem:[#allocation2 + $0x70] sm:$0xff] %vm299, -inf
          %315 = vst.msk [vmem:[#allocation2 + $0x78] sm:$0xff] %vm299, -inf
          %316 = vst.msk [vmem:[#allocation3] sm:$0xff] %vm299, 0.0
          %317 = vst.msk [vmem:[#allocation3 + $0x8] sm:$0xff] %vm299, 0.0
          %318 = vst.msk [vmem:[#allocation3 + $0x10] sm:$0xff] %vm299, 0.0
          %319 = vst.msk [vmem:[#allocation3 + $0x18] sm:$0xff] %vm299, 0.0
          %320 = vst.msk [vmem:[#allocation3 + $0x20] sm:$0xff] %vm299, 0.0
          %321 = vst.msk [vmem:[#allocation3 + $0x28] sm:$0xff] %vm299, 0.0
          %322 = vst.msk [vmem:[#allocation3 + $0x30] sm:$0xff] %vm299, 0.0
          %323 = vst.msk [vmem:[#allocation3 + $0x38] sm:$0xff] %vm299, 0.0
          %324 = vst.msk [vmem:[#allocation3 + $0x40] sm:$0xff] %vm299, 0.0
          %325 = vst.msk [vmem:[#allocation3 + $0x48] sm:$0xff] %vm299, 0.0
          %326 = vst.msk [vmem:[#allocation3 + $0x50] sm:$0xff] %vm299, 0.0
          %327 = vst.msk [vmem:[#allocation3 + $0x58] sm:$0xff] %vm299, 0.0
          %328 = vst.msk [vmem:[#allocation3 + $0x60] sm:$0xff] %vm299, 0.0
          %329 = vst.msk [vmem:[#allocation3 + $0x68] sm:$0xff] %vm299, 0.0
          %330 = vst.msk [vmem:[#allocation3 + $0x70] sm:$0xff] %vm299, 0.0
          %331 = vst.msk [vmem:[#allocation3 + $0x78] sm:$0xff] %vm299, 0.0
          %332 = vst.msk [vmem:[#allocation4] sm:$0xff] %vm299, 0.0
          %333 = vst.msk [vmem:[#allocation4 + $0x8] sm:$0xff] %vm299, 0.0
          %334 = vst.msk [vmem:[#allocation4 + $0x10] sm:$0xff] %vm299, 0.0
          %335 = vst.msk [vmem:[#allocation4 + $0x18] sm:$0xff] %vm299, 0.0
          %336 = vst.msk [vmem:[#allocation4 + $0x20] sm:$0xff] %vm299, 0.0
          %337 = vst.msk [vmem:[#allocation4 + $0x28] sm:$0xff] %vm299, 0.0
          %338 = vst.msk [vmem:[#allocation4 + $0x30] sm:$0xff] %vm299, 0.0
          %339 = vst.msk [vmem:[#allocation4 + $0x38] sm:$0xff] %vm299, 0.0
          %340 = vst.msk [vmem:[#allocation4 + $0x40] sm:$0xff] %vm299, 0.0
          %341 = vst.msk [vmem:[#allocation4 + $0x48] sm:$0xff] %vm299, 0.0
          %342 = vst.msk [vmem:[#allocation4 + $0x50] sm:$0xff] %vm299, 0.0
          %343 = vst.msk [vmem:[#allocation4 + $0x58] sm:$0xff] %vm299, 0.0
          %344 = vst.msk [vmem:[#allocation4 + $0x60] sm:$0xff] %vm299, 0.0
          %345 = vst.msk [vmem:[#allocation4 + $0x68] sm:$0xff] %vm299, 0.0
          %346 = vst.msk [vmem:[#allocation4 + $0x70] sm:$0xff] %vm299, 0.0
          %347 = vst.msk [vmem:[#allocation4 + $0x78] sm:$0xff] %vm299, 0.0
          %348 = vst.msk [vmem:[#allocation5] sm:$0xff] %vm299, 0.0
          %349 = vst.msk [vmem:[#allocation5 + $0x8] sm:$0xff] %vm299, 0.0
          %350 = vst.msk [vmem:[#allocation5 + $0x10] sm:$0xff] %vm299, 0.0
          %351 = vst.msk [vmem:[#allocation5 + $0x18] sm:$0xff] %vm299, 0.0
          %352 = vst.msk [vmem:[#allocation5 + $0x20] sm:$0xff] %vm299, 0.0
          %353 = vst.msk [vmem:[#allocation5 + $0x28] sm:$0xff] %vm299, 0.0
          %354 = vst.msk [vmem:[#allocation5 + $0x30] sm:$0xff] %vm299, 0.0
          %355 = vst.msk [vmem:[#allocation5 + $0x38] sm:$0xff] %vm299, 0.0
          %356 = vst.msk [vmem:[#allocation5 + $0x40] sm:$0xff] %vm299, 0.0
          %357 = vst.msk [vmem:[#allocation5 + $0x48] sm:$0xff] %vm299, 0.0
          %358 = vst.msk [vmem:[#allocation5 + $0x50] sm:$0xff] %vm299, 0.0
          %359 = vst.msk [vmem:[#allocation5 + $0x58] sm:$0xff] %vm299, 0.0
          %360 = vst.msk [vmem:[#allocation5 + $0x60] sm:$0xff] %vm299, 0.0
          %361 = vst.msk [vmem:[#allocation5 + $0x68] sm:$0xff] %vm299, 0.0
          %362 = vst.msk [vmem:[#allocation5 + $0x70] sm:$0xff] %vm299, 0.0
          %363 = vst.msk [vmem:[#allocation5 + $0x78] sm:$0xff] %vm299, 0.0
        $region48: #{tpu_custom_call.1} parent=35 // pred_fallthru
          _
        %v364 = vld [vmem:[%s244] sm:$0xff]
        %v365 = vld [vmem:[%s244 + $0x8] sm:$0xff]
        %v366 = vld [vmem:[%s244 + $0x10] sm:$0xff]
        %v367 = vld [vmem:[%s244 + $0x18] sm:$0xff]
        %v368 = vld [vmem:[%s244 + $0x20] sm:$0xff]
        %v369 = vld [vmem:[%s244 + $0x28] sm:$0xff]
        %v370 = vld [vmem:[%s244 + $0x30] sm:$0xff]
        %v371 = vld [vmem:[%s244 + $0x38] sm:$0xff]
        %v372 = vld [vmem:[%s244 + $0x40] sm:$0xff]
        %v373 = vld [vmem:[%s244 + $0x48] sm:$0xff]
        %v374 = vld [vmem:[%s244 + $0x50] sm:$0xff]
        %v375 = vld [vmem:[%s244 + $0x58] sm:$0xff]
        %v376 = vld [vmem:[%s244 + $0x60] sm:$0xff]
        %v377 = vld [vmem:[%s244 + $0x68] sm:$0xff]
        %v378 = vld [vmem:[%s244 + $0x70] sm:$0xff]
        %v379 = vld [vmem:[%s244 + $0x78] sm:$0xff]
        %v380 = vmul.f32 %v364, 14.285714
        %v381 = vmul.f32 %v365, 14.285714
        %v382 = vmul.f32 %v366, 14.285714
        %v383 = vmul.f32 %v367, 14.285714
        %v384 = vmul.f32 %v368, 14.285714
        %v385 = vmul.f32 %v369, 14.285714
        %v386 = vmul.f32 %v370, 14.285714
        %v387 = vmul.f32 %v371, 14.285714
        %v388 = vmul.f32 %v372, 14.285714
        %v389 = vmul.f32 %v373, 14.285714
        %v390 = vmul.f32 %v374, 14.285714
        %v391 = vmul.f32 %v375, 14.285714
        %v392 = vmul.f32 %v376, 14.285714
        %v393 = vmul.f32 %v377, 14.285714
        %v394 = vmul.f32 %v378, 14.285714
        %v395 = vmul.f32 %v379, 14.285714
        %v396 = vld [vmem:[%s253] sm:$0xff]
        %v397 = vld [vmem:[%s253 + $0x8] sm:$0xff]
        %v398 = vld [vmem:[%s253 + $0x10] sm:$0xff]
        %v399 = vld [vmem:[%s253 + $0x18] sm:$0xff]
        %v400 = vld [vmem:[%s253 + $0x20] sm:$0xff]
        %v401 = vld [vmem:[%s253 + $0x28] sm:$0xff]
        %v402 = vld [vmem:[%s253 + $0x30] sm:$0xff]
        %v403 = vld [vmem:[%s253 + $0x38] sm:$0xff]
        %v404 = vld [vmem:[%s253 + $0x40] sm:$0xff]
        %v405 = vld [vmem:[%s253 + $0x48] sm:$0xff]
        %v406 = vld [vmem:[%s253 + $0x50] sm:$0xff]
        %v407 = vld [vmem:[%s253 + $0x58] sm:$0xff]
        %v408 = vld [vmem:[%s253 + $0x60] sm:$0xff]
        %v409 = vld [vmem:[%s253 + $0x68] sm:$0xff]
        %v410 = vld [vmem:[%s253 + $0x70] sm:$0xff]
        %v411 = vld [vmem:[%s253 + $0x78] sm:$0xff]
        %412 = vmatprep.subr.mxu0 0.0
        %413 = vmatpush1.msra.mxu0 %v396
        %414 = vmatprep.subr.mxu0 0.0
        %415 = vmatpush1.msra.mxu0 %v397
        %416 = vmatprep.subr.mxu0 0.0
        %417 = vmatpush1.msra.mxu0 %v398
        %418 = vmatprep.subr.mxu0 0.0
        %419 = vmatpush1.msra.mxu0 %v399
        %420 = vmatprep.subr.mxu0 0.0
        %421 = vmatpush1.msra.mxu0 %v400
        %422 = vmatprep.subr.mxu0 0.0
        %423 = vmatpush1.msra.mxu0 %v401
        %424 = vmatprep.subr.mxu0 0.0
        %425 = vmatpush1.msra.mxu0 %v402
        %426 = vmatprep.subr.mxu0 0.0
        %427 = vmatpush1.msra.mxu0 %v403
        %428 = vmatprep.subr.mxu0 0.0
        %429 = vmatpush1.msra.mxu0 %v404
        %430 = vmatprep.subr.mxu0 0.0
        %431 = vmatpush1.msra.mxu0 %v405
        %432 = vmatprep.subr.mxu0 0.0
        %433 = vmatpush1.msra.mxu0 %v406
        %434 = vmatprep.subr.mxu0 0.0
        %435 = vmatpush1.msra.mxu0 %v407
        %436 = vmatprep.subr.mxu0 0.0
        %437 = vmatpush1.msra.mxu0 %v408
        %438 = vmatprep.subr.mxu0 0.0
        %439 = vmatpush1.msra.mxu0 %v409
        %440 = vmatprep.subr.mxu0 0.0
        %441 = vmatpush1.msra.mxu0 %v410
        %442 = vmatprep.subr.mxu0 0.0
        %443 = vmatpush1.msra.mxu0 %v411
        %444 = vmatprep.subr.mxu0 0.0
        %445 = vmatpush1.msra.mxu0 0.0
        %446 = vmatprep.subr.mxu0 0.0
        %447 = vmatpush1.msra.mxu0 0.0
        %448 = vmatprep.subr.mxu0 0.0
        %449 = vmatpush1.msra.mxu0 0.0
        %450 = vmatprep.subr.mxu0 0.0
        %451 = vmatpush1.msra.mxu0 0.0
        %452 = vmatprep.subr.mxu0 0.0
        %453 = vmatpush1.msra.mxu0 0.0
        %454 = vmatprep.subr.mxu0 0.0
        %455 = vmatpush1.msra.mxu0 0.0
        %456 = vmatprep.subr.mxu0 0.0
        %457 = vmatpush1.msra.mxu0 0.0
        %458 = vmatprep.subr.mxu0 0.0
        %459 = vmatpush1.msra.mxu0 0.0
        %460 = vmatprep.subr.mxu0 0.0
        %461 = vmatpush1.msra.mxu0 0.0
        %462 = vmatprep.subr.mxu0 0.0
        %463 = vmatpush1.msra.mxu0 0.0
        %464 = vmatprep.subr.mxu0 0.0
        %465 = vmatpush1.msra.mxu0 0.0
        %466 = vmatprep.subr.mxu0 0.0
        %467 = vmatpush1.msra.mxu0 0.0
        %468 = vmatprep.subr.mxu0 0.0
        %469 = vmatpush1.msra.mxu0 0.0
        %470 = vmatprep.subr.mxu0 0.0
        %471 = vmatpush1.msra.mxu0 0.0
        %472 = vmatprep.subr.mxu0 0.0
        %473 = vmatpush1.msra.mxu0 0.0
        %474 = vmatprep.subr.mxu0 0.0
        %475 = vmatpush1.msra.mxu0 0.0
        %476 = vmatprep.mubr.f32.mxu0 0.0
        %477 = vmatmul.mubr.f32.gmra.mrb[0].mxu0 %v380
        %v478 = vpop.f32.mrb[0].mxu0
        %v479 = vadd.f32 0.0, %v478
        %v480 = vpop.f32.mrb[0].mxu0
        %481 = vmatprep.mubr.f32.mxu0 0.0
        %482 = vmatmul.mubr.f32.gmra.mrb[0].mxu0 %v381
        %v483 = vpop.f32.mrb[0].mxu0
        %v484 = vadd.f32 0.0, %v483
        %v485 = vpop.f32.mrb[0].mxu0
        %486 = vmatprep.mubr.f32.mxu0 0.0
        %487 = vmatmul.mubr.f32.gmra.mrb[0].mxu0 %v382
        %v488 = vpop.f32.mrb[0].mxu0
        %v489 = vadd.f32 0.0, %v488
        %v490 = vpop.f32.mrb[0].mxu0
        %491 = vmatprep.mubr.f32.mxu0 0.0
        %492 = vmatmul.mubr.f32.gmra.mrb[0].mxu0 %v383
        %v493 = vpop.f32.mrb[0].mxu0
        %v494 = vadd.f32 0.0, %v493
        %v495 = vpop.f32.mrb[0].mxu0
        %496 = vmatprep.mubr.f32.mxu0 0.0
        %497 = vmatmul.mubr.f32.gmra.mrb[0].mxu0 %v384
        %v498 = vpop.f32.mrb[0].mxu0
        %v499 = vadd.f32 0.0, %v498
        %v500 = vpop.f32.mrb[0].mxu0
        %501 = vmatprep.mubr.f32.mxu0 0.0
        %502 = vmatmul.mubr.f32.gmra.mrb[0].mxu0 %v385
        %v503 = vpop.f32.mrb[0].mxu0
        %v504 = vadd.f32 0.0, %v503
        %v505 = vpop.f32.mrb[0].mxu0
        %506 = vmatprep.mubr.f32.mxu0 0.0
        %507 = vmatmul.mubr.f32.gmra.mrb[0].mxu0 %v386
        %v508 = vpop.f32.mrb[0].mxu0
        %v509 = vadd.f32 0.0, %v508
        %v510 = vpop.f32.mrb[0].mxu0
        %511 = vmatprep.mubr.f32.mxu0 0.0
        %512 = vmatmul.mubr.f32.gmra.mrb[0].mxu0 %v387
        %v513 = vpop.f32.mrb[0].mxu0
        %v514 = vadd.f32 0.0, %v513
        %v515 = vpop.f32.mrb[0].mxu0
        %516 = vmatprep.mubr.f32.mxu0 0.0
        %517 = vmatmul.mubr.f32.gmra.mrb[0].mxu0 %v388
        %v518 = vpop.f32.mrb[0].mxu0
        %v519 = vadd.f32 0.0, %v518
        %v520 = vpop.f32.mrb[0].mxu0
        %521 = vmatprep.mubr.f32.mxu0 0.0
        %522 = vmatmul.mubr.f32.gmra.mrb[0].mxu0 %v389
        %v523 = vpop.f32.mrb[0].mxu0
        %v524 = vadd.f32 0.0, %v523
        %v525 = vpop.f32.mrb[0].mxu0
        %526 = vmatprep.mubr.f32.mxu0 0.0
        %527 = vmatmul.mubr.f32.gmra.mrb[0].mxu0 %v390
        %v528 = vpop.f32.mrb[0].mxu0
        %v529 = vadd.f32 0.0, %v528
        %v530 = vpop.f32.mrb[0].mxu0
        %531 = vmatprep.mubr.f32.mxu0 0.0
        %532 = vmatmul.mubr.f32.gmra.mrb[0].mxu0 %v391
        %v533 = vpop.f32.mrb[0].mxu0
        %v534 = vadd.f32 0.0, %v533
        %v535 = vpop.f32.mrb[0].mxu0
        %536 = vmatprep.mubr.f32.mxu0 0.0
        %537 = vmatmul.mubr.f32.gmra.mrb[0].mxu0 %v392
        %v538 = vpop.f32.mrb[0].mxu0
        %v539 = vadd.f32 0.0, %v538
        %v540 = vpop.f32.mrb[0].mxu0
        %541 = vmatprep.mubr.f32.mxu0 0.0
        %542 = vmatmul.mubr.f32.gmra.mrb[0].mxu0 %v393
        %v543 = vpop.f32.mrb[0].mxu0
        %v544 = vadd.f32 0.0, %v543
        %v545 = vpop.f32.mrb[0].mxu0
        %546 = vmatprep.mubr.f32.mxu0 0.0
        %547 = vmatmul.mubr.f32.gmra.mrb[0].mxu0 %v394
        %v548 = vpop.f32.mrb[0].mxu0
        %v549 = vadd.f32 0.0, %v548
        %v550 = vpop.f32.mrb[0].mxu0
        %551 = vmatprep.mubr.f32.mxu0 0.0
        %552 = vmatmul.mubr.f32.gmra.mrb[0].mxu0 %v395
        %v553 = vpop.f32.mrb[0].mxu0
        %v554 = vadd.f32 0.0, %v553
        %v555 = vpop.f32.mrb[0].mxu0
        %556 = vdwg.mxu0
        %s557 = smul.u32 %s28, 128
        %v558 = vlaneseq
        %v559 = vshrl.u32 %v558, 7
        %v560 = vadd.s32 %v559, 8
        %v561 = vadd.s32 %v559, 16
        %v562 = vadd.s32 %v559, 24
        %v563 = vadd.s32 %v559, 32
        %v564 = vadd.s32 %v559, 40
        %v565 = vadd.s32 %v559, 48
        %v566 = vadd.s32 %v559, 56
        %v567 = vadd.s32 %v559, 64
        %v568 = vadd.s32 %v559, 72
        %v569 = vadd.s32 %v559, 80
        %v570 = vadd.s32 %v559, 88
        %v571 = vadd.s32 %v559, 96
        %v572 = vadd.s32 %v559, 104
        %v573 = vadd.s32 %v559, 112
        %v574 = vadd.s32 %v559, 120
        %v575 = vstv %s557
        %v576 = vadd.s32 %v575, %v559
        %v577 = vadd.s32 %v575, %v560
        %v578 = vadd.s32 %v575, %v561
        %v579 = vadd.s32 %v575, %v562
        %v580 = vadd.s32 %v575, %v563
        %v581 = vadd.s32 %v575, %v564
        %v582 = vadd.s32 %v575, %v565
        %v583 = vadd.s32 %v575, %v566
        %v584 = vadd.s32 %v575, %v567
        %v585 = vadd.s32 %v575, %v568
        %v586 = vadd.s32 %v575, %v569
        %v587 = vadd.s32 %v575, %v570
        %v588 = vadd.s32 %v575, %v571
        %v589 = vadd.s32 %v575, %v572
        %v590 = vadd.s32 %v575, %v573
        %v591 = vadd.s32 %v575, %v574
        %s592 = smul.u32 %s29, 128
        %v593 = vlaneseq
        %v594 = vand.u32 %v593, 127
        %v595 = vstv %s592
        %v596 = vadd.s32 %v595, %v594
        %vm597 = vcmp.ne.s32.totalorder %v576, %v596
        %vm598 = vcmp.ne.s32.totalorder %v577, %v596
        %vm599 = vcmp.ne.s32.totalorder %v578, %v596
        %vm600 = vcmp.ne.s32.totalorder %v579, %v596
        %vm601 = vcmp.ne.s32.totalorder %v580, %v596
        %vm602 = vcmp.ne.s32.totalorder %v581, %v596
        %vm603 = vcmp.ne.s32.totalorder %v582, %v596
        %vm604 = vcmp.ne.s32.totalorder %v583, %v596
        %vm605 = vcmp.ne.s32.totalorder %v584, %v596
        %vm606 = vcmp.ne.s32.totalorder %v585, %v596
        %vm607 = vcmp.ne.s32.totalorder %v586, %v596
        %vm608 = vcmp.ne.s32.totalorder %v587, %v596
        %vm609 = vcmp.ne.s32.totalorder %v588, %v596
        %vm610 = vcmp.ne.s32.totalorder %v589, %v596
        %vm611 = vcmp.ne.s32.totalorder %v590, %v596
        %vm612 = vcmp.ne.s32.totalorder %v591, %v596
        %v613 = vsel %vm597, 1, 0
        %v614 = vsel %vm598, 1, 0
        %v615 = vsel %vm599, 1, 0
        %v616 = vsel %vm600, 1, 0
        %v617 = vsel %vm601, 1, 0
        %v618 = vsel %vm602, 1, 0
        %v619 = vsel %vm603, 1, 0
        %v620 = vsel %vm604, 1, 0
        %v621 = vsel %vm605, 1, 0
        %v622 = vsel %vm606, 1, 0
        %v623 = vsel %vm607, 1, 0
        %v624 = vsel %vm608, 1, 0
        %v625 = vsel %vm609, 1, 0
        %v626 = vsel %vm610, 1, 0
        %v627 = vsel %vm611, 1, 0
        %v628 = vsel %vm612, 1, 0
        %v629 = vcvt.s32.f32 %v613
        %v630 = vcvt.s32.f32 %v614
        %v631 = vcvt.s32.f32 %v615
        %v632 = vcvt.s32.f32 %v616
        %v633 = vcvt.s32.f32 %v617
        %v634 = vcvt.s32.f32 %v618
        %v635 = vcvt.s32.f32 %v619
        %v636 = vcvt.s32.f32 %v620
        %v637 = vcvt.s32.f32 %v621
        %v638 = vcvt.s32.f32 %v622
        %v639 = vcvt.s32.f32 %v623
        %v640 = vcvt.s32.f32 %v624
        %v641 = vcvt.s32.f32 %v625
        %v642 = vcvt.s32.f32 %v626
        %v643 = vcvt.s32.f32 %v627
        %v644 = vcvt.s32.f32 %v628
        %v645 = vld [vmem:[%s291] sm:$0x1]
        %646 = vxpose.xlu0.b32.start [1/16] %v645, 128
        %647 = vxpose.xlu0.b32.cont [2/16] 0.0, 128
        %648 = vxpose.xlu0.b32.cont [3/16] 0.0, 128
        %649 = vxpose.xlu0.b32.cont [4/16] 0.0, 128
        %650 = vxpose.xlu0.b32.cont [5/16] 0.0, 128
        %651 = vxpose.xlu0.b32.cont [6/16] 0.0, 128
        %652 = vxpose.xlu0.b32.cont [7/16] 0.0, 128
        %653 = vxpose.xlu0.b32.cont [8/16] 0.0, 128
        %654 = vxpose.xlu0.b32.cont [9/16] 0.0, 128
        %655 = vxpose.xlu0.b32.cont [10/16] 0.0, 128
        %656 = vxpose.xlu0.b32.cont [11/16] 0.0, 128
        %657 = vxpose.xlu0.b32.cont [12/16] 0.0, 128
        %658 = vxpose.xlu0.b32.cont [13/16] 0.0, 128
        %659 = vxpose.xlu0.b32.cont [14/16] 0.0, 128
        %660 = vxpose.xlu0.b32.cont [15/16] 0.0, 128
        %661 = vxpose.xlu0.b32.end [16/16] 0.0, 128
        %v662 = vpop.trf.xlu0
        %v663 = vpop.trf.xlu0
        %v664 = vpop.trf.xlu0
        %v665 = vpop.trf.xlu0
        %v666 = vpop.trf.xlu0
        %v667 = vpop.trf.xlu0
        %v668 = vpop.trf.xlu0
        %v669 = vpop.trf.xlu0
        %v670 = vpop.trf.xlu0
        %v671 = vpop.trf.xlu0
        %v672 = vpop.trf.xlu0
        %v673 = vpop.trf.xlu0
        %v674 = vpop.trf.xlu0
        %v675 = vpop.trf.xlu0
        %v676 = vpop.trf.xlu0
        %v677 = vpop.trf.xlu0
        %v678 = vld [vmem:[%s294] sm:$0x1]
        %680 = vset.pattern.permute.xlu0 0
        %681 = vperm.xlu0 %680, %v662
        %v682 = vpop.permute.xlu0 %681
        %685 = vset.pattern.permute.xlu0 0
        %686 = vperm.xlu0 %685, %v663
        %v687 = vpop.permute.xlu0 %686
        %690 = vset.pattern.permute.xlu0 0
        %691 = vperm.xlu0 %690, %v664
        %v692 = vpop.permute.xlu0 %691
        %695 = vset.pattern.permute.xlu0 0
        %696 = vperm.xlu0 %695, %v665
        %v697 = vpop.permute.xlu0 %696
        %700 = vset.pattern.permute.xlu0 0
        %701 = vperm.xlu0 %700, %v666
        %v702 = vpop.permute.xlu0 %701
        %705 = vset.pattern.permute.xlu0 0
        %706 = vperm.xlu0 %705, %v667
        %v707 = vpop.permute.xlu0 %706
        %710 = vset.pattern.permute.xlu0 0
        %711 = vperm.xlu0 %710, %v668
        %v712 = vpop.permute.xlu0 %711
        %715 = vset.pattern.permute.xlu0 0
        %716 = vperm.xlu0 %715, %v669
        %v717 = vpop.permute.xlu0 %716
        %720 = vset.pattern.permute.xlu0 0
        %721 = vperm.xlu0 %720, %v670
        %v722 = vpop.permute.xlu0 %721
        %725 = vset.pattern.permute.xlu0 0
        %726 = vperm.xlu0 %725, %v671
        %v727 = vpop.permute.xlu0 %726
        %730 = vset.pattern.permute.xlu0 0
        %731 = vperm.xlu0 %730, %v672
        %v732 = vpop.permute.xlu0 %731
        %735 = vset.pattern.permute.xlu0 0
        %736 = vperm.xlu0 %735, %v673
        %v737 = vpop.permute.xlu0 %736
        %740 = vset.pattern.permute.xlu0 0
        %741 = vperm.xlu0 %740, %v674
        %v742 = vpop.permute.xlu0 %741
        %745 = vset.pattern.permute.xlu0 0
        %746 = vperm.xlu0 %745, %v675
        %v747 = vpop.permute.xlu0 %746
        %750 = vset.pattern.permute.xlu0 0
        %751 = vperm.xlu0 %750, %v676
        %v752 = vpop.permute.xlu0 %751
        %755 = vset.pattern.permute.xlu0 0
        %756 = vperm.xlu0 %755, %v677
        %v757 = vpop.permute.xlu0 %756
        %v760 = vlaneseq
        %v761 = vshrl.u32 %v760, 7
        %v762 = vsub.s32 0, %v761
        %v763 = vrot.slane %v678, %v762
        %vm765 = vcmp.eq.f32.partialorder %v682, %v763
        %vm766 = vcmp.eq.f32.partialorder %v687, %v763
        %vm767 = vcmp.eq.f32.partialorder %v692, %v763
        %vm768 = vcmp.eq.f32.partialorder %v697, %v763
        %vm769 = vcmp.eq.f32.partialorder %v702, %v763
        %vm770 = vcmp.eq.f32.partialorder %v707, %v763
        %vm771 = vcmp.eq.f32.partialorder %v712, %v763
        %vm772 = vcmp.eq.f32.partialorder %v717, %v763
        %vm773 = vcmp.eq.f32.partialorder %v722, %v763
        %vm774 = vcmp.eq.f32.partialorder %v727, %v763
        %vm775 = vcmp.eq.f32.partialorder %v732, %v763
        %vm776 = vcmp.eq.f32.partialorder %v737, %v763
        %vm777 = vcmp.eq.f32.partialorder %v742, %v763
        %vm778 = vcmp.eq.f32.partialorder %v747, %v763
        %vm779 = vcmp.eq.f32.partialorder %v752, %v763
        %vm780 = vcmp.eq.f32.partialorder %v757, %v763
        %v781 = vsel %vm765, 1, 0
        %v782 = vsel %vm766, 1, 0
        %v783 = vsel %vm767, 1, 0
        %v784 = vsel %vm768, 1, 0
        %v785 = vsel %vm769, 1, 0
        %v786 = vsel %vm770, 1, 0
        %v787 = vsel %vm771, 1, 0
        %v788 = vsel %vm772, 1, 0
        %v789 = vsel %vm773, 1, 0
        %v790 = vsel %vm774, 1, 0
        %v791 = vsel %vm775, 1, 0
        %v792 = vsel %vm776, 1, 0
        %v793 = vsel %vm777, 1, 0
        %v794 = vsel %vm778, 1, 0
        %v795 = vsel %vm779, 1, 0
        %v796 = vsel %vm780, 1, 0
        %v797 = vcvt.s32.f32 %v781
        %v798 = vcvt.s32.f32 %v782
        %v799 = vcvt.s32.f32 %v783
        %v800 = vcvt.s32.f32 %v784
        %v801 = vcvt.s32.f32 %v785
        %v802 = vcvt.s32.f32 %v786
        %v803 = vcvt.s32.f32 %v787
        %v804 = vcvt.s32.f32 %v788
        %v805 = vcvt.s32.f32 %v789
        %v806 = vcvt.s32.f32 %v790
        %v807 = vcvt.s32.f32 %v791
        %v808 = vcvt.s32.f32 %v792
        %v809 = vcvt.s32.f32 %v793
        %v810 = vcvt.s32.f32 %v794
        %v811 = vcvt.s32.f32 %v795
        %v812 = vcvt.s32.f32 %v796
        %v813 = vmul.f32 %v797, %v629
        %v814 = vmul.f32 %v798, %v630
        %v815 = vmul.f32 %v799, %v631
        %v816 = vmul.f32 %v800, %v632
        %v817 = vmul.f32 %v801, %v633
        %v818 = vmul.f32 %v802, %v634
        %v819 = vmul.f32 %v803, %v635
        %v820 = vmul.f32 %v804, %v636
        %v821 = vmul.f32 %v805, %v637
        %v822 = vmul.f32 %v806, %v638
        %v823 = vmul.f32 %v807, %v639
        %v824 = vmul.f32 %v808, %v640
        %v825 = vmul.f32 %v809, %v641
        %v826 = vmul.f32 %v810, %v642
        %v827 = vmul.f32 %v811, %v643
        %v828 = vmul.f32 %v812, %v644
        %v829 = vld [vmem:[#allocation2] sm:$0xff]
        %v830 = vld [vmem:[#allocation2 + $0x8] sm:$0xff]
        %v831 = vld [vmem:[#allocation2 + $0x10] sm:$0xff]
        %v832 = vld [vmem:[#allocation2 + $0x18] sm:$0xff]
        %v833 = vld [vmem:[#allocation2 + $0x20] sm:$0xff]
        %v834 = vld [vmem:[#allocation2 + $0x28] sm:$0xff]
        %v835 = vld [vmem:[#allocation2 + $0x30] sm:$0xff]
        %v836 = vld [vmem:[#allocation2 + $0x38] sm:$0xff]
        %v837 = vld [vmem:[#allocation2 + $0x40] sm:$0xff]
        %v838 = vld [vmem:[#allocation2 + $0x48] sm:$0xff]
        %v839 = vld [vmem:[#allocation2 + $0x50] sm:$0xff]
        %v840 = vld [vmem:[#allocation2 + $0x58] sm:$0xff]
        %v841 = vld [vmem:[#allocation2 + $0x60] sm:$0xff]
        %v842 = vld [vmem:[#allocation2 + $0x68] sm:$0xff]
        %v843 = vld [vmem:[#allocation2 + $0x70] sm:$0xff]
        %v844 = vld [vmem:[#allocation2 + $0x78] sm:$0xff]
        %845 = vmax.xlane.f32.xlu0 %v479
        %v846 = vpop.xlane.xlu0 %845
        %847 = vmax.xlane.f32.xlu0 %v484
        %v848 = vpop.xlane.xlu0 %847
        %849 = vmax.xlane.f32.xlu0 %v489
        %v850 = vpop.xlane.xlu0 %849
        %851 = vmax.xlane.f32.xlu0 %v494
        %v852 = vpop.xlane.xlu0 %851
        %853 = vmax.xlane.f32.xlu0 %v499
        %v854 = vpop.xlane.xlu0 %853
        %855 = vmax.xlane.f32.xlu0 %v504
        %v856 = vpop.xlane.xlu0 %855
        %857 = vmax.xlane.f32.xlu0 %v509
        %v858 = vpop.xlane.xlu0 %857
        %859 = vmax.xlane.f32.xlu0 %v514
        %v860 = vpop.xlane.xlu0 %859
        %861 = vmax.xlane.f32.xlu0 %v519
        %v862 = vpop.xlane.xlu0 %861
        %863 = vmax.xlane.f32.xlu0 %v524
        %v864 = vpop.xlane.xlu0 %863
        %865 = vmax.xlane.f32.xlu0 %v529
        %v866 = vpop.xlane.xlu0 %865
        %867 = vmax.xlane.f32.xlu0 %v534
        %v868 = vpop.xlane.xlu0 %867
        %869 = vmax.xlane.f32.xlu0 %v539
        %v870 = vpop.xlane.xlu0 %869
        %871 = vmax.xlane.f32.xlu0 %v544
        %v872 = vpop.xlane.xlu0 %871
        %873 = vmax.xlane.f32.xlu0 %v549
        %v874 = vpop.xlane.xlu0 %873
        %875 = vmax.xlane.f32.xlu0 %v554
        %v876 = vpop.xlane.xlu0 %875
        %v877 = vmax.f32 %v829, %v846
        %v878 = vmax.f32 %v830, %v848
        %v879 = vmax.f32 %v831, %v850
        %v880 = vmax.f32 %v832, %v852
        %v881 = vmax.f32 %v833, %v854
        %v882 = vmax.f32 %v834, %v856
        %v883 = vmax.f32 %v835, %v858
        %v884 = vmax.f32 %v836, %v860
        %v885 = vmax.f32 %v837, %v862
        %v886 = vmax.f32 %v838, %v864
        %v887 = vmax.f32 %v839, %v866
        %v888 = vmax.f32 %v840, %v868
        %v889 = vmax.f32 %v841, %v870
        %v890 = vmax.f32 %v842, %v872
        %v891 = vmax.f32 %v843, %v874
        %v892 = vmax.f32 %v844, %v876
        %v893 = vsub.f32 %v829, %v877
        %v894 = vsub.f32 %v830, %v878
        %v895 = vsub.f32 %v831, %v879
        %v896 = vsub.f32 %v832, %v880
        %v897 = vsub.f32 %v833, %v881
        %v898 = vsub.f32 %v834, %v882
        %v899 = vsub.f32 %v835, %v883
        %v900 = vsub.f32 %v836, %v884
        %v901 = vsub.f32 %v837, %v885
        %v902 = vsub.f32 %v838, %v886
        %v903 = vsub.f32 %v839, %v887
        %v904 = vsub.f32 %v840, %v888
        %v905 = vsub.f32 %v841, %v889
        %v906 = vsub.f32 %v842, %v890
        %v907 = vsub.f32 %v843, %v891
        %v908 = vsub.f32 %v844, %v892
        %v909 = vmul.f32 %v893, 1.442695
        %v910 = vpow.pop %v909
        %v911 = vmul.f32 %v894, 1.442695
        %v912 = vpow.pop %v911
        %v913 = vmul.f32 %v895, 1.442695
        %v914 = vpow.pop %v913
        %v915 = vmul.f32 %v896, 1.442695
        %v916 = vpow.pop %v915
        %v917 = vmul.f32 %v897, 1.442695
        %v918 = vpow.pop %v917
        %v919 = vmul.f32 %v898, 1.442695
        %v920 = vpow.pop %v919
        %v921 = vmul.f32 %v899, 1.442695
        %v922 = vpow.pop %v921
        %v923 = vmul.f32 %v900, 1.442695
        %v924 = vpow.pop %v923
        %v925 = vmul.f32 %v901, 1.442695
        %v926 = vpow.pop %v925
        %v927 = vmul.f32 %v902, 1.442695
        %v928 = vpow.pop %v927
        %v929 = vmul.f32 %v903, 1.442695
        %v930 = vpow.pop %v929
        %v931 = vmul.f32 %v904, 1.442695
        %v932 = vpow.pop %v931
        %v933 = vmul.f32 %v905, 1.442695
        %v934 = vpow.pop %v933
        %v935 = vmul.f32 %v906, 1.442695
        %v936 = vpow.pop %v935
        %v937 = vmul.f32 %v907, 1.442695
        %v938 = vpow.pop %v937
        %v939 = vmul.f32 %v908, 1.442695
        %v940 = vpow.pop %v939
        %v941 = vld [vmem:[#allocation3] sm:$0xff]
        %v942 = vld [vmem:[#allocation3 + $0x8] sm:$0xff]
        %v943 = vld [vmem:[#allocation3 + $0x10] sm:$0xff]
        %v944 = vld [vmem:[#allocation3 + $0x18] sm:$0xff]
        %v945 = vld [vmem:[#allocation3 + $0x20] sm:$0xff]
        %v946 = vld [vmem:[#allocation3 + $0x28] sm:$0xff]
        %v947 = vld [vmem:[#allocation3 + $0x30] sm:$0xff]
        %v948 = vld [vmem:[#allocation3 + $0x38] sm:$0xff]
        %v949 = vld [vmem:[#allocation3 + $0x40] sm:$0xff]
        %v950 = vld [vmem:[#allocation3 + $0x48] sm:$0xff]
        %v951 = vld [vmem:[#allocation3 + $0x50] sm:$0xff]
        %v952 = vld [vmem:[#allocation3 + $0x58] sm:$0xff]
        %v953 = vld [vmem:[#allocation3 + $0x60] sm:$0xff]
        %v954 = vld [vmem:[#allocation3 + $0x68] sm:$0xff]
        %v955 = vld [vmem:[#allocation3 + $0x70] sm:$0xff]
        %v956 = vld [vmem:[#allocation3 + $0x78] sm:$0xff]
        %v957 = vmul.f32 %v910, %v941
        %v958 = vmul.f32 %v912, %v942
        %v959 = vmul.f32 %v914, %v943
        %v960 = vmul.f32 %v916, %v944
        %v961 = vmul.f32 %v918, %v945
        %v962 = vmul.f32 %v920, %v946
        %v963 = vmul.f32 %v922, %v947
        %v964 = vmul.f32 %v924, %v948
        %v965 = vmul.f32 %v926, %v949
        %v966 = vmul.f32 %v928, %v950
        %v967 = vmul.f32 %v930, %v951
        %v968 = vmul.f32 %v932, %v952
        %v969 = vmul.f32 %v934, %v953
        %v970 = vmul.f32 %v936, %v954
        %v971 = vmul.f32 %v938, %v955
        %v972 = vmul.f32 %v940, %v956
        %974 = vset.pattern.permute.xlu0 0
        %975 = vperm.xlu0 %974, %v877
        %v976 = vpop.permute.xlu0 %975
        %979 = vset.pattern.permute.xlu0 0
        %980 = vperm.xlu0 %979, %v878
        %v981 = vpop.permute.xlu0 %980
        %984 = vset.pattern.permute.xlu0 0
        %985 = vperm.xlu0 %984, %v879
        %v986 = vpop.permute.xlu0 %985
        %989 = vset.pattern.permute.xlu0 0
        %990 = vperm.xlu0 %989, %v880
        %v991 = vpop.permute.xlu0 %990
        %994 = vset.pattern.permute.xlu0 0
        %995 = vperm.xlu0 %994, %v881
        %v996 = vpop.permute.xlu0 %995
        %999 = vset.pattern.permute.xlu0 0
        %1000 = vperm.xlu0 %999, %v882
        %v1001 = vpop.permute.xlu0 %1000
        %1004 = vset.pattern.permute.xlu0 0
        %1005 = vperm.xlu0 %1004, %v883
        %v1006 = vpop.permute.xlu0 %1005
        %1009 = vset.pattern.permute.xlu0 0
        %1010 = vperm.xlu0 %1009, %v884
        %v1011 = vpop.permute.xlu0 %1010
        %1014 = vset.pattern.permute.xlu0 0
        %1015 = vperm.xlu0 %1014, %v885
        %v1016 = vpop.permute.xlu0 %1015
        %1019 = vset.pattern.permute.xlu0 0
        %1020 = vperm.xlu0 %1019, %v886
        %v1021 = vpop.permute.xlu0 %1020
        %1024 = vset.pattern.permute.xlu0 0
        %1025 = vperm.xlu0 %1024, %v887
        %v1026 = vpop.permute.xlu0 %1025
        %1029 = vset.pattern.permute.xlu0 0
        %1030 = vperm.xlu0 %1029, %v888
        %v1031 = vpop.permute.xlu0 %1030
        %1034 = vset.pattern.permute.xlu0 0
        %1035 = vperm.xlu0 %1034, %v889
        %v1036 = vpop.permute.xlu0 %1035
        %1039 = vset.pattern.permute.xlu0 0
        %1040 = vperm.xlu0 %1039, %v890
        %v1041 = vpop.permute.xlu0 %1040
        %1044 = vset.pattern.permute.xlu0 0
        %1045 = vperm.xlu0 %1044, %v891
        %v1046 = vpop.permute.xlu0 %1045
        %1049 = vset.pattern.permute.xlu0 0
        %1050 = vperm.xlu0 %1049, %v892
        %v1051 = vpop.permute.xlu0 %1050
        %v1053 = vsub.f32 %v479, %v976
        %v1054 = vsub.f32 %v484, %v981
        %v1055 = vsub.f32 %v489, %v986
        %v1056 = vsub.f32 %v494, %v991
        %v1057 = vsub.f32 %v499, %v996
        %v1058 = vsub.f32 %v504, %v1001
        %v1059 = vsub.f32 %v509, %v1006
        %v1060 = vsub.f32 %v514, %v1011
        %v1061 = vsub.f32 %v519, %v1016
        %v1062 = vsub.f32 %v524, %v1021
        %v1063 = vsub.f32 %v529, %v1026
        %v1064 = vsub.f32 %v534, %v1031
        %v1065 = vsub.f32 %v539, %v1036
        %v1066 = vsub.f32 %v544, %v1041
        %v1067 = vsub.f32 %v549, %v1046
        %v1068 = vsub.f32 %v554, %v1051
        %v1069 = vmul.f32 %v1053, 1.442695
        %v1070 = vpow.pop %v1069
        %v1071 = vmul.f32 %v1054, 1.442695
        %v1072 = vpow.pop %v1071
        %v1073 = vmul.f32 %v1055, 1.442695
        %v1074 = vpow.pop %v1073
        %v1075 = vmul.f32 %v1056, 1.442695
        %v1076 = vpow.pop %v1075
        %v1077 = vmul.f32 %v1057, 1.442695
        %v1078 = vpow.pop %v1077
        %v1079 = vmul.f32 %v1058, 1.442695
        %v1080 = vpow.pop %v1079
        %v1081 = vmul.f32 %v1059, 1.442695
        %v1082 = vpow.pop %v1081
        %v1083 = vmul.f32 %v1060, 1.442695
        %v1084 = vpow.pop %v1083
        %v1085 = vmul.f32 %v1061, 1.442695
        %v1086 = vpow.pop %v1085
        %v1087 = vmul.f32 %v1062, 1.442695
        %v1088 = vpow.pop %v1087
        %v1089 = vmul.f32 %v1063, 1.442695
        %v1090 = vpow.pop %v1089
        %v1091 = vmul.f32 %v1064, 1.442695
        %v1092 = vpow.pop %v1091
        %v1093 = vmul.f32 %v1065, 1.442695
        %v1094 = vpow.pop %v1093
        %v1095 = vmul.f32 %v1066, 1.442695
        %v1096 = vpow.pop %v1095
        %v1097 = vmul.f32 %v1067, 1.442695
        %v1098 = vpow.pop %v1097
        %v1099 = vmul.f32 %v1068, 1.442695
        %v1100 = vpow.pop %v1099
        %v1101 = vmul.f32 %v1070, %v629
        %v1102 = vmul.f32 %v1072, %v630
        %v1103 = vmul.f32 %v1074, %v631
        %v1104 = vmul.f32 %v1076, %v632
        %v1105 = vmul.f32 %v1078, %v633
        %v1106 = vmul.f32 %v1080, %v634
        %v1107 = vmul.f32 %v1082, %v635
        %v1108 = vmul.f32 %v1084, %v636
        %v1109 = vmul.f32 %v1086, %v637
        %v1110 = vmul.f32 %v1088, %v638
        %v1111 = vmul.f32 %v1090, %v639
        %v1112 = vmul.f32 %v1092, %v640
        %v1113 = vmul.f32 %v1094, %v641
        %v1114 = vmul.f32 %v1096, %v642
        %v1115 = vmul.f32 %v1098, %v643
        %v1116 = vmul.f32 %v1100, %v644
        %1117 = vadd.xlane.f32.xlu0 %v1101
        %v1118 = vpop.xlane.xlu0 %1117
        %1119 = vadd.xlane.f32.xlu0 %v1102
        %v1120 = vpop.xlane.xlu0 %1119
        %1121 = vadd.xlane.f32.xlu0 %v1103
        %v1122 = vpop.xlane.xlu0 %1121
        %1123 = vadd.xlane.f32.xlu0 %v1104
        %v1124 = vpop.xlane.xlu0 %1123
        %1125 = vadd.xlane.f32.xlu0 %v1105
        %v1126 = vpop.xlane.xlu0 %1125
        %1127 = vadd.xlane.f32.xlu0 %v1106
        %v1128 = vpop.xlane.xlu0 %1127
        %1129 = vadd.xlane.f32.xlu0 %v1107
        %v1130 = vpop.xlane.xlu0 %1129
        %1131 = vadd.xlane.f32.xlu0 %v1108
        %v1132 = vpop.xlane.xlu0 %1131
        %1133 = vadd.xlane.f32.xlu0 %v1109
        %v1134 = vpop.xlane.xlu0 %1133
        %1135 = vadd.xlane.f32.xlu0 %v1110
        %v1136 = vpop.xlane.xlu0 %1135
        %1137 = vadd.xlane.f32.xlu0 %v1111
        %v1138 = vpop.xlane.xlu0 %1137
        %1139 = vadd.xlane.f32.xlu0 %v1112
        %v1140 = vpop.xlane.xlu0 %1139
        %1141 = vadd.xlane.f32.xlu0 %v1113
        %v1142 = vpop.xlane.xlu0 %1141
        %1143 = vadd.xlane.f32.xlu0 %v1114
        %v1144 = vpop.xlane.xlu0 %1143
        %1145 = vadd.xlane.f32.xlu0 %v1115
        %v1146 = vpop.xlane.xlu0 %1145
        %1147 = vadd.xlane.f32.xlu0 %v1116
        %v1148 = vpop.xlane.xlu0 %1147
        %v1149 = vadd.f32 %v957, %v1118
        %v1150 = vadd.f32 %v958, %v1120
        %v1151 = vadd.f32 %v959, %v1122
        %v1152 = vadd.f32 %v960, %v1124
        %v1153 = vadd.f32 %v961, %v1126
        %v1154 = vadd.f32 %v962, %v1128
        %v1155 = vadd.f32 %v963, %v1130
        %v1156 = vadd.f32 %v964, %v1132
        %v1157 = vadd.f32 %v965, %v1134
        %v1158 = vadd.f32 %v966, %v1136
        %v1159 = vadd.f32 %v967, %v1138
        %v1160 = vadd.f32 %v968, %v1140
        %v1161 = vadd.f32 %v969, %v1142
        %v1162 = vadd.f32 %v970, %v1144
        %v1163 = vadd.f32 %v971, %v1146
        %v1164 = vadd.f32 %v972, %v1148
        %vm1165 = vcmask 7168
        %1166 = vst.msk [vmem:[#allocation3] sm:$0xff] %vm1165, %v1149
        %1167 = vst.msk [vmem:[#allocation3 + $0x8] sm:$0xff] %vm1165, %v1150
        %1168 = vst.msk [vmem:[#allocation3 + $0x10] sm:$0xff] %vm1165, %v1151
        %1169 = vst.msk [vmem:[#allocation3 + $0x18] sm:$0xff] %vm1165, %v1152
        %1170 = vst.msk [vmem:[#allocation3 + $0x20] sm:$0xff] %vm1165, %v1153
        %1171 = vst.msk [vmem:[#allocation3 + $0x28] sm:$0xff] %vm1165, %v1154
        %1172 = vst.msk [vmem:[#allocation3 + $0x30] sm:$0xff] %vm1165, %v1155
        %1173 = vst.msk [vmem:[#allocation3 + $0x38] sm:$0xff] %vm1165, %v1156
        %1174 = vst.msk [vmem:[#allocation3 + $0x40] sm:$0xff] %vm1165, %v1157
        %1175 = vst.msk [vmem:[#allocation3 + $0x48] sm:$0xff] %vm1165, %v1158
        %1176 = vst.msk [vmem:[#allocation3 + $0x50] sm:$0xff] %vm1165, %v1159
        %1177 = vst.msk [vmem:[#allocation3 + $0x58] sm:$0xff] %vm1165, %v1160
        %1178 = vst.msk [vmem:[#allocation3 + $0x60] sm:$0xff] %vm1165, %v1161
        %1179 = vst.msk [vmem:[#allocation3 + $0x68] sm:$0xff] %vm1165, %v1162
        %1180 = vst.msk [vmem:[#allocation3 + $0x70] sm:$0xff] %vm1165, %v1163
        %1181 = vst.msk [vmem:[#allocation3 + $0x78] sm:$0xff] %vm1165, %v1164
        %v1182 = vld [vmem:[#allocation4] sm:$0xff]
        %v1183 = vld [vmem:[#allocation4 + $0x8] sm:$0xff]
        %v1184 = vld [vmem:[#allocation4 + $0x10] sm:$0xff]
        %v1185 = vld [vmem:[#allocation4 + $0x18] sm:$0xff]
        %v1186 = vld [vmem:[#allocation4 + $0x20] sm:$0xff]
        %v1187 = vld [vmem:[#allocation4 + $0x28] sm:$0xff]
        %v1188 = vld [vmem:[#allocation4 + $0x30] sm:$0xff]
        %v1189 = vld [vmem:[#allocation4 + $0x38] sm:$0xff]
        %v1190 = vld [vmem:[#allocation4 + $0x40] sm:$0xff]
        %v1191 = vld [vmem:[#allocation4 + $0x48] sm:$0xff]
        %v1192 = vld [vmem:[#allocation4 + $0x50] sm:$0xff]
        %v1193 = vld [vmem:[#allocation4 + $0x58] sm:$0xff]
        %v1194 = vld [vmem:[#allocation4 + $0x60] sm:$0xff]
        %v1195 = vld [vmem:[#allocation4 + $0x68] sm:$0xff]
        %v1196 = vld [vmem:[#allocation4 + $0x70] sm:$0xff]
        %v1197 = vld [vmem:[#allocation4 + $0x78] sm:$0xff]
        %v1198 = vmul.f32 %v813, %v479
        %v1199 = vmul.f32 %v814, %v484
        %v1200 = vmul.f32 %v815, %v489
        %v1201 = vmul.f32 %v816, %v494
        %v1202 = vmul.f32 %v817, %v499
        %v1203 = vmul.f32 %v818, %v504
        %v1204 = vmul.f32 %v819, %v509
        %v1205 = vmul.f32 %v820, %v514
        %v1206 = vmul.f32 %v821, %v519
        %v1207 = vmul.f32 %v822, %v524
        %v1208 = vmul.f32 %v823, %v529
        %v1209 = vmul.f32 %v824, %v534
        %v1210 = vmul.f32 %v825, %v539
        %v1211 = vmul.f32 %v826, %v544
        %v1212 = vmul.f32 %v827, %v549
        %v1213 = vmul.f32 %v828, %v554
        %1214 = vadd.xlane.f32.xlu0 %v1198
        %v1215 = vpop.xlane.xlu0 %1214
        %1216 = vadd.xlane.f32.xlu0 %v1199
        %v1217 = vpop.xlane.xlu0 %1216
        %1218 = vadd.xlane.f32.xlu0 %v1200
        %v1219 = vpop.xlane.xlu0 %1218
        %1220 = vadd.xlane.f32.xlu0 %v1201
        %v1221 = vpop.xlane.xlu0 %1220
        %1222 = vadd.xlane.f32.xlu0 %v1202
        %v1223 = vpop.xlane.xlu0 %1222
        %1224 = vadd.xlane.f32.xlu0 %v1203
        %v1225 = vpop.xlane.xlu0 %1224
        %1226 = vadd.xlane.f32.xlu0 %v1204
        %v1227 = vpop.xlane.xlu0 %1226
        %1228 = vadd.xlane.f32.xlu0 %v1205
        %v1229 = vpop.xlane.xlu0 %1228
        %1230 = vadd.xlane.f32.xlu0 %v1206
        %v1231 = vpop.xlane.xlu0 %1230
        %1232 = vadd.xlane.f32.xlu0 %v1207
        %v1233 = vpop.xlane.xlu0 %1232
        %1234 = vadd.xlane.f32.xlu0 %v1208
        %v1235 = vpop.xlane.xlu0 %1234
        %1236 = vadd.xlane.f32.xlu0 %v1209
        %v1237 = vpop.xlane.xlu0 %1236
        %1238 = vadd.xlane.f32.xlu0 %v1210
        %v1239 = vpop.xlane.xlu0 %1238
        %1240 = vadd.xlane.f32.xlu0 %v1211
        %v1241 = vpop.xlane.xlu0 %1240
        %1242 = vadd.xlane.f32.xlu0 %v1212
        %v1243 = vpop.xlane.xlu0 %1242
        %1244 = vadd.xlane.f32.xlu0 %v1213
        %v1245 = vpop.xlane.xlu0 %1244
        %v1246 = vadd.f32 %v1182, %v1215
        %v1247 = vadd.f32 %v1183, %v1217
        %v1248 = vadd.f32 %v1184, %v1219
        %v1249 = vadd.f32 %v1185, %v1221
        %v1250 = vadd.f32 %v1186, %v1223
        %v1251 = vadd.f32 %v1187, %v1225
        %v1252 = vadd.f32 %v1188, %v1227
        %v1253 = vadd.f32 %v1189, %v1229
        %v1254 = vadd.f32 %v1190, %v1231
        %v1255 = vadd.f32 %v1191, %v1233
        %v1256 = vadd.f32 %v1192, %v1235
        %v1257 = vadd.f32 %v1193, %v1237
        %v1258 = vadd.f32 %v1194, %v1239
        %v1259 = vadd.f32 %v1195, %v1241
        %v1260 = vadd.f32 %v1196, %v1243
        %v1261 = vadd.f32 %v1197, %v1245
        %1262 = vst.msk [vmem:[#allocation4] sm:$0xff] %vm1165, %v1246
        %1263 = vst.msk [vmem:[#allocation4 + $0x8] sm:$0xff] %vm1165, %v1247
        %1264 = vst.msk [vmem:[#allocation4 + $0x10] sm:$0xff] %vm1165, %v1248
        %1265 = vst.msk [vmem:[#allocation4 + $0x18] sm:$0xff] %vm1165, %v1249
        %1266 = vst.msk [vmem:[#allocation4 + $0x20] sm:$0xff] %vm1165, %v1250
        %1267 = vst.msk [vmem:[#allocation4 + $0x28] sm:$0xff] %vm1165, %v1251
        %1268 = vst.msk [vmem:[#allocation4 + $0x30] sm:$0xff] %vm1165, %v1252
        %1269 = vst.msk [vmem:[#allocation4 + $0x38] sm:$0xff] %vm1165, %v1253
        %1270 = vst.msk [vmem:[#allocation4 + $0x40] sm:$0xff] %vm1165, %v1254
        %1271 = vst.msk [vmem:[#allocation4 + $0x48] sm:$0xff] %vm1165, %v1255
        %1272 = vst.msk [vmem:[#allocation4 + $0x50] sm:$0xff] %vm1165, %v1256
        %1273 = vst.msk [vmem:[#allocation4 + $0x58] sm:$0xff] %vm1165, %v1257
        %1274 = vst.msk [vmem:[#allocation4 + $0x60] sm:$0xff] %vm1165, %v1258
        %1275 = vst.msk [vmem:[#allocation4 + $0x68] sm:$0xff] %vm1165, %v1259
        %1276 = vst.msk [vmem:[#allocation4 + $0x70] sm:$0xff] %vm1165, %v1260
        %1277 = vst.msk [vmem:[#allocation4 + $0x78] sm:$0xff] %vm1165, %v1261
        %v1278 = vld [vmem:[#allocation5] sm:$0xff]
        %v1279 = vld [vmem:[#allocation5 + $0x8] sm:$0xff]
        %v1280 = vld [vmem:[#allocation5 + $0x10] sm:$0xff]
        %v1281 = vld [vmem:[#allocation5 + $0x18] sm:$0xff]
        %v1282 = vld [vmem:[#allocation5 + $0x20] sm:$0xff]
        %v1283 = vld [vmem:[#allocation5 + $0x28] sm:$0xff]
        %v1284 = vld [vmem:[#allocation5 + $0x30] sm:$0xff]
        %v1285 = vld [vmem:[#allocation5 + $0x38] sm:$0xff]
        %v1286 = vld [vmem:[#allocation5 + $0x40] sm:$0xff]
        %v1287 = vld [vmem:[#allocation5 + $0x48] sm:$0xff]
        %v1288 = vld [vmem:[#allocation5 + $0x50] sm:$0xff]
        %v1289 = vld [vmem:[#allocation5 + $0x58] sm:$0xff]
        %v1290 = vld [vmem:[#allocation5 + $0x60] sm:$0xff]
        %v1291 = vld [vmem:[#allocation5 + $0x68] sm:$0xff]
        %v1292 = vld [vmem:[#allocation5 + $0x70] sm:$0xff]
        %v1293 = vld [vmem:[#allocation5 + $0x78] sm:$0xff]
        %1294 = vadd.xlane.f32.xlu0 %v813
        %v1295 = vpop.xlane.xlu0 %1294
        %1296 = vadd.xlane.f32.xlu0 %v814
        %v1297 = vpop.xlane.xlu0 %1296
        %1298 = vadd.xlane.f32.xlu0 %v815
        %v1299 = vpop.xlane.xlu0 %1298
        %1300 = vadd.xlane.f32.xlu0 %v816
        %v1301 = vpop.xlane.xlu0 %1300
        %1302 = vadd.xlane.f32.xlu0 %v817
        %v1303 = vpop.xlane.xlu0 %1302
        %1304 = vadd.xlane.f32.xlu0 %v818
        %v1305 = vpop.xlane.xlu0 %1304
        %1306 = vadd.xlane.f32.xlu0 %v819
        %v1307 = vpop.xlane.xlu0 %1306
        %1308 = vadd.xlane.f32.xlu0 %v820
        %v1309 = vpop.xlane.xlu0 %1308
        %1310 = vadd.xlane.f32.xlu0 %v821
        %v1311 = vpop.xlane.xlu0 %1310
        %1312 = vadd.xlane.f32.xlu0 %v822
        %v1313 = vpop.xlane.xlu0 %1312
        %1314 = vadd.xlane.f32.xlu0 %v823
        %v1315 = vpop.xlane.xlu0 %1314
        %1316 = vadd.xlane.f32.xlu0 %v824
        %v1317 = vpop.xlane.xlu0 %1316
        %1318 = vadd.xlane.f32.xlu0 %v825
        %v1319 = vpop.xlane.xlu0 %1318
        %1320 = vadd.xlane.f32.xlu0 %v826
        %v1321 = vpop.xlane.xlu0 %1320
        %1322 = vadd.xlane.f32.xlu0 %v827
        %v1323 = vpop.xlane.xlu0 %1322
        %1324 = vadd.xlane.f32.xlu0 %v828
        %v1325 = vpop.xlane.xlu0 %1324
        %v1326 = vadd.f32 %v1278, %v1295
        %v1327 = vadd.f32 %v1279, %v1297
        %v1328 = vadd.f32 %v1280, %v1299
        %v1329 = vadd.f32 %v1281, %v1301
        %v1330 = vadd.f32 %v1282, %v1303
        %v1331 = vadd.f32 %v1283, %v1305
        %v1332 = vadd.f32 %v1284, %v1307
        %v1333 = vadd.f32 %v1285, %v1309
        %v1334 = vadd.f32 %v1286, %v1311
        %v1335 = vadd.f32 %v1287, %v1313
        %v1336 = vadd.f32 %v1288, %v1315
        %v1337 = vadd.f32 %v1289, %v1317
        %v1338 = vadd.f32 %v1290, %v1319
        %v1339 = vadd.f32 %v1291, %v1321
        %v1340 = vadd.f32 %v1292, %v1323
        %v1341 = vadd.f32 %v1293, %v1325
        %1342 = vst.msk [vmem:[#allocation5] sm:$0xff] %vm1165, %v1326
        %1343 = vst.msk [vmem:[#allocation5 + $0x8] sm:$0xff] %vm1165, %v1327
        %1344 = vst.msk [vmem:[#allocation5 + $0x10] sm:$0xff] %vm1165, %v1328
        %1345 = vst.msk [vmem:[#allocation5 + $0x18] sm:$0xff] %vm1165, %v1329
        %1346 = vst.msk [vmem:[#allocation5 + $0x20] sm:$0xff] %vm1165, %v1330
        %1347 = vst.msk [vmem:[#allocation5 + $0x28] sm:$0xff] %vm1165, %v1331
        %1348 = vst.msk [vmem:[#allocation5 + $0x30] sm:$0xff] %vm1165, %v1332
        %1349 = vst.msk [vmem:[#allocation5 + $0x38] sm:$0xff] %vm1165, %v1333
        %1350 = vst.msk [vmem:[#allocation5 + $0x40] sm:$0xff] %vm1165, %v1334
        %1351 = vst.msk [vmem:[#allocation5 + $0x48] sm:$0xff] %vm1165, %v1335
        %1352 = vst.msk [vmem:[#allocation5 + $0x50] sm:$0xff] %vm1165, %v1336
        %1353 = vst.msk [vmem:[#allocation5 + $0x58] sm:$0xff] %vm1165, %v1337
        %1354 = vst.msk [vmem:[#allocation5 + $0x60] sm:$0xff] %vm1165, %v1338
        %1355 = vst.msk [vmem:[#allocation5 + $0x68] sm:$0xff] %vm1165, %v1339
        %1356 = vst.msk [vmem:[#allocation5 + $0x70] sm:$0xff] %vm1165, %v1340
        %1357 = vst.msk [vmem:[#allocation5 + $0x78] sm:$0xff] %vm1165, %v1341
        %1358 = vst.msk [vmem:[#allocation2] sm:$0xff] %vm1165, %v877
        %1359 = vst.msk [vmem:[#allocation2 + $0x8] sm:$0xff] %vm1165, %v878
        %1360 = vst.msk [vmem:[#allocation2 + $0x10] sm:$0xff] %vm1165, %v879
        %1361 = vst.msk [vmem:[#allocation2 + $0x18] sm:$0xff] %vm1165, %v880
        %1362 = vst.msk [vmem:[#allocation2 + $0x20] sm:$0xff] %vm1165, %v881
        %1363 = vst.msk [vmem:[#allocation2 + $0x28] sm:$0xff] %vm1165, %v882
        %1364 = vst.msk [vmem:[#allocation2 + $0x30] sm:$0xff] %vm1165, %v883
        %1365 = vst.msk [vmem:[#allocation2 + $0x38] sm:$0xff] %vm1165, %v884
        %1366 = vst.msk [vmem:[#allocation2 + $0x40] sm:$0xff] %vm1165, %v885
        %1367 = vst.msk [vmem:[#allocation2 + $0x48] sm:$0xff] %vm1165, %v886
        %1368 = vst.msk [vmem:[#allocation2 + $0x50] sm:$0xff] %vm1165, %v887
        %1369 = vst.msk [vmem:[#allocation2 + $0x58] sm:$0xff] %vm1165, %v888
        %1370 = vst.msk [vmem:[#allocation2 + $0x60] sm:$0xff] %vm1165, %v889
        %1371 = vst.msk [vmem:[#allocation2 + $0x68] sm:$0xff] %vm1165, %v890
        %1372 = vst.msk [vmem:[#allocation2 + $0x70] sm:$0xff] %vm1165, %v891
        %1373 = vst.msk [vmem:[#allocation2 + $0x78] sm:$0xff] %vm1165, %v892
        %p1374 = scmp.eq.s32.totalorder %s29, 1
        // Predicated region
        $region49: #{tpu_custom_call.1} parent=35 // pred_check
          %p1375 = pneg %p1374
        $region50: #{tpu_custom_call.1} parent=35 // pred_check_branch
          %1377 = sbr.rel (%p1375) target = $region52
        $region51: #{tpu_custom_call.1} parent=35 // pred_region
          %v1378 = vld [vmem:[#allocation5] sm:$0xff]
          %v1379 = vld [vmem:[#allocation5 + $0x8] sm:$0xff]
          %v1380 = vld [vmem:[#allocation5 + $0x10] sm:$0xff]
          %v1381 = vld [vmem:[#allocation5 + $0x18] sm:$0xff]
          %v1382 = vld [vmem:[#allocation5 + $0x20] sm:$0xff]
          %v1383 = vld [vmem:[#allocation5 + $0x28] sm:$0xff]
          %v1384 = vld [vmem:[#allocation5 + $0x30] sm:$0xff]
          %v1385 = vld [vmem:[#allocation5 + $0x38] sm:$0xff]
          %v1386 = vld [vmem:[#allocation5 + $0x40] sm:$0xff]
          %v1387 = vld [vmem:[#allocation5 + $0x48] sm:$0xff]
          %v1388 = vld [vmem:[#allocation5 + $0x50] sm:$0xff]
          %v1389 = vld [vmem:[#allocation5 + $0x58] sm:$0xff]
          %v1390 = vld [vmem:[#allocation5 + $0x60] sm:$0xff]
          %v1391 = vld [vmem:[#allocation5 + $0x68] sm:$0xff]
          %v1392 = vld [vmem:[#allocation5 + $0x70] sm:$0xff]
          %v1393 = vld [vmem:[#allocation5 + $0x78] sm:$0xff]
          %vm1394 = vcmp.lt.f32.partialorder %v1378, 1e-06
          %vm1395 = vcmp.lt.f32.partialorder %v1379, 1e-06
          %vm1396 = vcmp.lt.f32.partialorder %v1380, 1e-06
          %vm1397 = vcmp.lt.f32.partialorder %v1381, 1e-06
          %vm1398 = vcmp.lt.f32.partialorder %v1382, 1e-06
          %vm1399 = vcmp.lt.f32.partialorder %v1383, 1e-06
          %vm1400 = vcmp.lt.f32.partialorder %v1384, 1e-06
          %vm1401 = vcmp.lt.f32.partialorder %v1385, 1e-06
          %vm1402 = vcmp.lt.f32.partialorder %v1386, 1e-06
          %vm1403 = vcmp.lt.f32.partialorder %v1387, 1e-06
          %vm1404 = vcmp.lt.f32.partialorder %v1388, 1e-06
          %vm1405 = vcmp.lt.f32.partialorder %v1389, 1e-06
          %vm1406 = vcmp.lt.f32.partialorder %v1390, 1e-06
          %vm1407 = vcmp.lt.f32.partialorder %v1391, 1e-06
          %vm1408 = vcmp.lt.f32.partialorder %v1392, 1e-06
          %vm1409 = vcmp.lt.f32.partialorder %v1393, 1e-06
          %v1410 = vsel %vm1394, 1.0, %v1378
          %v1411 = vsel %vm1395, 1.0, %v1379
          %v1412 = vsel %vm1396, 1.0, %v1380
          %v1413 = vsel %vm1397, 1.0, %v1381
          %v1414 = vsel %vm1398, 1.0, %v1382
          %v1415 = vsel %vm1399, 1.0, %v1383
          %v1416 = vsel %vm1400, 1.0, %v1384
          %v1417 = vsel %vm1401, 1.0, %v1385
          %v1418 = vsel %vm1402, 1.0, %v1386
          %v1419 = vsel %vm1403, 1.0, %v1387
          %v1420 = vsel %vm1404, 1.0, %v1388
          %v1421 = vsel %vm1405, 1.0, %v1389
          %v1422 = vsel %vm1406, 1.0, %v1390
          %v1423 = vsel %vm1407, 1.0, %v1391
          %v1424 = vsel %vm1408, 1.0, %v1392
          %v1425 = vsel %vm1409, 1.0, %v1393
          %v1426 = vld [vmem:[#allocation2] sm:$0xff]
          %v1427 = vld [vmem:[#allocation2 + $0x8] sm:$0xff]
          %v1428 = vld [vmem:[#allocation2 + $0x10] sm:$0xff]
          %v1429 = vld [vmem:[#allocation2 + $0x18] sm:$0xff]
          %v1430 = vld [vmem:[#allocation2 + $0x20] sm:$0xff]
          %v1431 = vld [vmem:[#allocation2 + $0x28] sm:$0xff]
          %v1432 = vld [vmem:[#allocation2 + $0x30] sm:$0xff]
          %v1433 = vld [vmem:[#allocation2 + $0x38] sm:$0xff]
          %v1434 = vld [vmem:[#allocation2 + $0x40] sm:$0xff]
          %v1435 = vld [vmem:[#allocation2 + $0x48] sm:$0xff]
          %v1436 = vld [vmem:[#allocation2 + $0x50] sm:$0xff]
          %v1437 = vld [vmem:[#allocation2 + $0x58] sm:$0xff]
          %v1438 = vld [vmem:[#allocation2 + $0x60] sm:$0xff]
          %v1439 = vld [vmem:[#allocation2 + $0x68] sm:$0xff]
          %v1440 = vld [vmem:[#allocation2 + $0x70] sm:$0xff]
          %v1441 = vld [vmem:[#allocation2 + $0x78] sm:$0xff]
          %v1442 = vld [vmem:[#allocation3] sm:$0xff]
          %v1443 = vld [vmem:[#allocation3 + $0x8] sm:$0xff]
          %v1444 = vld [vmem:[#allocation3 + $0x10] sm:$0xff]
          %v1445 = vld [vmem:[#allocation3 + $0x18] sm:$0xff]
          %v1446 = vld [vmem:[#allocation3 + $0x20] sm:$0xff]
          %v1447 = vld [vmem:[#allocation3 + $0x28] sm:$0xff]
          %v1448 = vld [vmem:[#allocation3 + $0x30] sm:$0xff]
          %v1449 = vld [vmem:[#allocation3 + $0x38] sm:$0xff]
          %v1450 = vld [vmem:[#allocation3 + $0x40] sm:$0xff]
          %v1451 = vld [vmem:[#allocation3 + $0x48] sm:$0xff]
          %v1452 = vld [vmem:[#allocation3 + $0x50] sm:$0xff]
          %v1453 = vld [vmem:[#allocation3 + $0x58] sm:$0xff]
          %v1454 = vld [vmem:[#allocation3 + $0x60] sm:$0xff]
          %v1455 = vld [vmem:[#allocation3 + $0x68] sm:$0xff]
          %v1456 = vld [vmem:[#allocation3 + $0x70] sm:$0xff]
          %v1457 = vld [vmem:[#allocation3 + $0x78] sm:$0xff]
          %v1458 = vlog2.pop %v1442
          %v1459 = vmul.f32 %v1458, 0.6931472
          %v1460 = vlog2.pop %v1443
          %v1461 = vmul.f32 %v1460, 0.6931472
          %v1462 = vlog2.pop %v1444
          %v1463 = vmul.f32 %v1462, 0.6931472
          %v1464 = vlog2.pop %v1445
          %v1465 = vmul.f32 %v1464, 0.6931472
          %v1466 = vlog2.pop %v1446
          %v1467 = vmul.f32 %v1466, 0.6931472
          %v1468 = vlog2.pop %v1447
          %v1469 = vmul.f32 %v1468, 0.6931472
          %v1470 = vlog2.pop %v1448
          %v1471 = vmul.f32 %v1470, 0.6931472
          %v1472 = vlog2.pop %v1449
          %v1473 = vmul.f32 %v1472, 0.6931472
          %v1474 = vlog2.pop %v1450
          %v1475 = vmul.f32 %v1474, 0.6931472
          %v1476 = vlog2.pop %v1451
          %v1477 = vmul.f32 %v1476, 0.6931472
          %v1478 = vlog2.pop %v1452
          %v1479 = vmul.f32 %v1478, 0.6931472
          %v1480 = vlog2.pop %v1453
          %v1481 = vmul.f32 %v1480, 0.6931472
          %v1482 = vlog2.pop %v1454
          %v1483 = vmul.f32 %v1482, 0.6931472
          %v1484 = vlog2.pop %v1455
          %v1485 = vmul.f32 %v1484, 0.6931472
          %v1486 = vlog2.pop %v1456
          %v1487 = vmul.f32 %v1486, 0.6931472
          %v1488 = vlog2.pop %v1457
          %v1489 = vmul.f32 %v1488, 0.6931472
          %v1490 = vadd.f32 %v1426, %v1459
          %v1491 = vadd.f32 %v1427, %v1461
          %v1492 = vadd.f32 %v1428, %v1463
          %v1493 = vadd.f32 %v1429, %v1465
          %v1494 = vadd.f32 %v1430, %v1467
          %v1495 = vadd.f32 %v1431, %v1469
          %v1496 = vadd.f32 %v1432, %v1471
          %v1497 = vadd.f32 %v1433, %v1473
          %v1498 = vadd.f32 %v1434, %v1475
          %v1499 = vadd.f32 %v1435, %v1477
          %v1500 = vadd.f32 %v1436, %v1479
          %v1501 = vadd.f32 %v1437, %v1481
          %v1502 = vadd.f32 %v1438, %v1483
          %v1503 = vadd.f32 %v1439, %v1485
          %v1504 = vadd.f32 %v1440, %v1487
          %v1505 = vadd.f32 %v1441, %v1489
          %v1506 = vld [vmem:[#allocation4] sm:$0xff]
          %v1507 = vld [vmem:[#allocation4 + $0x8] sm:$0xff]
          %v1508 = vld [vmem:[#allocation4 + $0x10] sm:$0xff]
          %v1509 = vld [vmem:[#allocation4 + $0x18] sm:$0xff]
          %v1510 = vld [vmem:[#allocation4 + $0x20] sm:$0xff]
          %v1511 = vld [vmem:[#allocation4 + $0x28] sm:$0xff]
          %v1512 = vld [vmem:[#allocation4 + $0x30] sm:$0xff]
          %v1513 = vld [vmem:[#allocation4 + $0x38] sm:$0xff]
          %v1514 = vld [vmem:[#allocation4 + $0x40] sm:$0xff]
          %v1515 = vld [vmem:[#allocation4 + $0x48] sm:$0xff]
          %v1516 = vld [vmem:[#allocation4 + $0x50] sm:$0xff]
          %v1517 = vld [vmem:[#allocation4 + $0x58] sm:$0xff]
          %v1518 = vld [vmem:[#allocation4 + $0x60] sm:$0xff]
          %v1519 = vld [vmem:[#allocation4 + $0x68] sm:$0xff]
          %v1520 = vld [vmem:[#allocation4 + $0x70] sm:$0xff]
          %v1521 = vld [vmem:[#allocation4 + $0x78] sm:$0xff]
          %v1522 = vmul.f32 %v1378, %v1490
          %v1523 = vmul.f32 %v1379, %v1491
          %v1524 = vmul.f32 %v1380, %v1492
          %v1525 = vmul.f32 %v1381, %v1493
          %v1526 = vmul.f32 %v1382, %v1494
          %v1527 = vmul.f32 %v1383, %v1495
          %v1528 = vmul.f32 %v1384, %v1496
          %v1529 = vmul.f32 %v1385, %v1497
          %v1530 = vmul.f32 %v1386, %v1498
          %v1531 = vmul.f32 %v1387, %v1499
          %v1532 = vmul.f32 %v1388, %v1500
          %v1533 = vmul.f32 %v1389, %v1501
          %v1534 = vmul.f32 %v1390, %v1502
          %v1535 = vmul.f32 %v1391, %v1503
          %v1536 = vmul.f32 %v1392, %v1504
          %v1537 = vmul.f32 %v1393, %v1505
          %v1538 = vsub.f32 %v1506, %v1522
          %v1539 = vsub.f32 %v1507, %v1523
          %v1540 = vsub.f32 %v1508, %v1524
          %v1541 = vsub.f32 %v1509, %v1525
          %v1542 = vsub.f32 %v1510, %v1526
          %v1543 = vsub.f32 %v1511, %v1527
          %v1544 = vsub.f32 %v1512, %v1528
          %v1545 = vsub.f32 %v1513, %v1529
          %v1546 = vsub.f32 %v1514, %v1530
          %v1547 = vsub.f32 %v1515, %v1531
          %v1548 = vsub.f32 %v1516, %v1532
          %v1549 = vsub.f32 %v1517, %v1533
          %v1550 = vsub.f32 %v1518, %v1534
          %v1551 = vsub.f32 %v1519, %v1535
          %v1552 = vsub.f32 %v1520, %v1536
          %v1553 = vsub.f32 %v1521, %v1537
          %v1554 = vrcp.pop %v1410
          %v1555 = vmul.f32 %v1538, %v1554
          %v1556 = vrcp.pop %v1411
          %v1557 = vmul.f32 %v1539, %v1556
          %v1558 = vrcp.pop %v1412
          %v1559 = vmul.f32 %v1540, %v1558
          %v1560 = vrcp.pop %v1413
          %v1561 = vmul.f32 %v1541, %v1560
          %v1562 = vrcp.pop %v1414
          %v1563 = vmul.f32 %v1542, %v1562
          %v1564 = vrcp.pop %v1415
          %v1565 = vmul.f32 %v1543, %v1564
          %v1566 = vrcp.pop %v1416
          %v1567 = vmul.f32 %v1544, %v1566
          %v1568 = vrcp.pop %v1417
          %v1569 = vmul.f32 %v1545, %v1568
          %v1570 = vrcp.pop %v1418
          %v1571 = vmul.f32 %v1546, %v1570
          %v1572 = vrcp.pop %v1419
          %v1573 = vmul.f32 %v1547, %v1572
          %v1574 = vrcp.pop %v1420
          %v1575 = vmul.f32 %v1548, %v1574
          %v1576 = vrcp.pop %v1421
          %v1577 = vmul.f32 %v1549, %v1576
          %v1578 = vrcp.pop %v1422
          %v1579 = vmul.f32 %v1550, %v1578
          %v1580 = vrcp.pop %v1423
          %v1581 = vmul.f32 %v1551, %v1580
          %v1582 = vrcp.pop %v1424
          %v1583 = vmul.f32 %v1552, %v1582
          %v1584 = vrcp.pop %v1425
          %v1585 = vmul.f32 %v1553, %v1584
          %v1586 = vmul.f32 %v1555, -1.0
          %v1587 = vmul.f32 %v1557, -1.0
          %v1588 = vmul.f32 %v1559, -1.0
          %v1589 = vmul.f32 %v1561, -1.0
          %v1590 = vmul.f32 %v1563, -1.0
          %v1591 = vmul.f32 %v1565, -1.0
          %v1592 = vmul.f32 %v1567, -1.0
          %v1593 = vmul.f32 %v1569, -1.0
          %v1594 = vmul.f32 %v1571, -1.0
          %v1595 = vmul.f32 %v1573, -1.0
          %v1596 = vmul.f32 %v1575, -1.0
          %v1597 = vmul.f32 %v1577, -1.0
          %v1598 = vmul.f32 %v1579, -1.0
          %v1599 = vmul.f32 %v1581, -1.0
          %v1600 = vmul.f32 %v1583, -1.0
          %v1601 = vmul.f32 %v1585, -1.0
          %1602 = vxpose.xlu0.b32.start [1/16] %v1586, 128
          %1603 = vxpose.xlu0.b32.cont [2/16] %v1587, 128
          %1604 = vxpose.xlu0.b32.cont [3/16] %v1588, 128
          %1605 = vxpose.xlu0.b32.cont [4/16] %v1589, 128
          %1606 = vxpose.xlu0.b32.cont [5/16] %v1590, 128
          %1607 = vxpose.xlu0.b32.cont [6/16] %v1591, 128
          %1608 = vxpose.xlu0.b32.cont [7/16] %v1592, 128
          %1609 = vxpose.xlu0.b32.cont [8/16] %v1593, 128
          %1610 = vxpose.xlu0.b32.cont [9/16] %v1594, 128
          %1611 = vxpose.xlu0.b32.cont [10/16] %v1595, 128
          %1612 = vxpose.xlu0.b32.cont [11/16] %v1596, 128
          %1613 = vxpose.xlu0.b32.cont [12/16] %v1597, 128
          %1614 = vxpose.xlu0.b32.cont [13/16] %v1598, 128
          %1615 = vxpose.xlu0.b32.cont [14/16] %v1599, 128
          %1616 = vxpose.xlu0.b32.cont [15/16] %v1600, 128
          %1617 = vxpose.xlu0.b32.end [16/16] %v1601, 128
          %v1618 = vpop.trf.xlu0
          %v1619 = vpop.trf.xlu0
          %v1620 = vpop.trf.xlu0
          %v1621 = vpop.trf.xlu0
          %v1622 = vpop.trf.xlu0
          %v1623 = vpop.trf.xlu0
          %v1624 = vpop.trf.xlu0
          %v1625 = vpop.trf.xlu0
          %v1626 = vpop.trf.xlu0
          %v1627 = vpop.trf.xlu0
          %v1628 = vpop.trf.xlu0
          %v1629 = vpop.trf.xlu0
          %v1630 = vpop.trf.xlu0
          %v1631 = vpop.trf.xlu0
          %v1632 = vpop.trf.xlu0
          %v1633 = vpop.trf.xlu0
          %1634 = vst [vmem:[%s287] sm:$0x1] %v1618
        $region52: #{tpu_custom_call.1} parent=35 // pred_fallthru
          _
        %s1635 = sand.u32 %s148, 1
        %s1636 = scalar_lea.sflag [#allocation8], %s1635
        %s1637 = sand.u32 %s148, 1
        %s1638 = scalar_lea.vmem [#allocation11], %s1637
        // Predicated region
        $region53: #{tpu_custom_call.1} parent=35 // pred_check
          %p1639 = pneg %p158
        $region54: #{tpu_custom_call.1} parent=35 // pred_check_branch
          %1641 = sbr.rel (%p1639) target = $region56
        $region55: #{tpu_custom_call.1} parent=35 // pred_region
          %s1643 = ssub.s32 16, 16
          %1644 = vsyncadd %s1636, %s1643
          %s1645 = smul.addr %s28, 16
          %s1646 = scalar_lea.hbm %s4, %s1645
          %s1648 = sshll.u32 %s1638, 4
          %s1649 = int_to_ptr.vmem [resolvable:$true] %s1648
          %1651 = dma.vmem_to_hbm [thread:$0]  %s1649, 16, %s1646, %s1636
        $region56: #{tpu_custom_call.1} parent=35 // pred_fallthru
          _
      $region36: #{tpu_custom_call.1} parent=5 // pred_fallthru
        _
      %p1652 = scmp.le.s32.totalorder 2, %s19
      // Predicated region
      $region57: #{tpu_custom_call.1} parent=5 // pred_check
        %p1653 = pneg %p1652
      $region58: #{tpu_custom_call.1} parent=5 // pred_check_branch
        %1655 = sbr.rel (%p1653) target = $region60
      $region59: #{tpu_custom_call.1} parent=5 // pred_region
        %s1656 = ssub.s32 %s19, 2
        // Predicated region
        $region61: #{tpu_custom_call.1} parent=59 // pred_check
          %p1657 = pneg %p164
        $region62: #{tpu_custom_call.1} parent=59 // pred_check_branch
          %1659 = sbr.rel (%p1657) target = $region64
        $region63: #{tpu_custom_call.1} parent=59 // pred_region
          %s1660 = sand.u32 %s149, 1
          %s1661 = scalar_lea.sflag [#allocation8], %s1660
          %s1662 = sand.u32 %s149, 1
          %s1663 = scalar_lea.vmem [#allocation11], %s1662
          %1664 = dma.done %s1661, 16
        $region64: #{tpu_custom_call.1} parent=59 // pred_fallthru
          _
      $region60: #{tpu_custom_call.1} parent=5 // pred_fallthru
        _
    $region6: #{tpu_custom_call.1} parent=1 // loop_footer
      %s23 = sadd.s32 1, %s19
    $region7: #{tpu_custom_call.1} parent=1 // loop_footer_branch
      %18 = sbr.rel target = $region3
    $region8: #{tpu_custom_call.1} parent=1 // loop_exit
      _
    %1665 = vsyncpa [#allocation7], 1
    %s1666 = scalar_lea.sflag [#allocation7], 1
    %1667 = vsyncpa %s1666, 1
    %1668 = vsyncpa [#allocation10], 1
    %s1669 = scalar_lea.sflag [#allocation10], 1
    %1670 = vsyncpa %s1669, 1
    %1671 = vsyncpa [#allocation8], 1
    %s1672 = scalar_lea.sflag [#allocation8], 1
    %1673 = vsyncpa %s1672, 1

</llo_original>
